<compile_context>
chip_gen: v7x
topology: tpu7x:2x2x1
jax: 0.10.0
libtpu: 0.0.40
codegen_flags: <defaults>
</compile_context>

<pallas_src>
import jax
import jax.numpy as jnp
import numpy as np
from jax import lax
from jax.experimental import pallas as pl
from jax.experimental.pallas import tpu as pltpu

LN_EPS = 1e-5  # nn.LayerNorm default eps
TXT_KEYS = ("whole", "five", "nine")
_N_PER_KEY = {"whole": 1, "five": 5, "nine": 9}


def _round_up(x, m):
    return ((x + m - 1) // m) * m


def _default_vmem_limit_bytes():
    cap = 128 * 1024 * 1024
    try:  # generation-aware: v7x has only 64 MiB physical VMEM per core
        cap = int(pltpu.get_tpu_info().vmem_capacity_bytes)
    except Exception:
        pass
    return int(min(64 * 1024 * 1024, cap // 2))


# ---------------------------------------------------------------------------
# Pallas kernel: fused LayerNorm -> Linear -> (+bias +add [, zero-row mask])
# ---------------------------------------------------------------------------
def _make_fused_ln_mm_kernel(mask_rows: bool):
    def kernel(x_ref, w_ref, b_ref, add_ref, o_ref, xn_ref, keep_ref=None):
        j = pl.program_id(2)

        # LN (and the zero-row reduction) computed once per row tile, reused
        # for every Fout tile j.
        @pl.when(j == 0)
        def _():
            x = x_ref[0].astype(jnp.float32)                       # (tm, Fin)
            mu = jnp.mean(x, axis=-1, keepdims=True)
            var = jnp.mean(jnp.square(x - mu), axis=-1, keepdims=True)
            xn_ref[...] = ((x - mu) * lax.rsqrt(var + LN_EPS)).astype(xn_ref.dtype)
            if mask_rows:
                keep_ref[...] = (jnp.sum(jnp.abs(x), axis=-1, keepdims=True)
                                 != 0.0).astype(jnp.float32)

        y = jnp.dot(xn_ref[...], w_ref[0],
                    preferred_element_type=jnp.float32)            # MXU (tm, tn)
        y = y + b_ref[0].astype(jnp.float32) + add_ref[0].astype(jnp.float32)
        if mask_rows:
            y = y * keep_ref[...]                                  # (tm, 1) bcast
        o_ref[0] = y.astype(o_ref.dtype)

    return kernel


def fused_ln_linear(x, w, b, add, *, mask_rows=False, tm=256,
                    w_resident_bytes=6 * 1024 * 1024,
                    out_dtype=jnp.bfloat16, x_dtype=jnp.bfloat16,
                    vmem_limit_bytes=None):
    """out[s] = keep(x[s]) * (LayerNorm(x[s]) @ w + b + add[s]).

    x   : (S, R, Fin)       token rows (S = segments or batches)
    w   : (Sw, Fin, Fout)   LN-gamma-folded weight, Sw in {1, S}
    b   : (Sw, 1, Fout)     LN-beta-folded bias (f32)
    add : (S, Ra, Fout)     additive epilogue, Ra in {1, R} (row-broadcast if 1)
    returns (S, R, Fout) in out_dtype.
    """
    S, R, Fin = x.shape
    Sw, _, Fout = w.shape
    Ra = add.shape[1]
    assert Sw in (1, S) and Ra in (1, R)

    # Lane-dense output: Fout padded to a multiple of 128.  Keep the whole
    # Fout resident (tn = Fp) when the bf16 weight tile is small enough, so
    # each segment's weight block index never changes across row tiles and is
    # DMA'd once; otherwise tile Fout by 512.
    Fp = _round_up(Fout, 128)
    if Fin * Fp * 2 <= w_resident_bytes:
        tn = Fp
    else:
        tn = 512
        Fp = _round_up(Fout, tn)

    # Row tile: large by default, clamped so toy shapes don't compute padding.
    tm = max(16, min(tm, _round_up(R, 16)))
    Rp = _round_up(R, tm)

    x = x.astype(x_dtype)
    if Rp != R:
        x = jnp.pad(x, ((0, 0), (0, Rp - R), (0, 0)))
        if Ra != 1:
            add = jnp.pad(add, ((0, 0), (0, Rp - R), (0, 0)))
    if Fp != Fout:
        w = jnp.pad(w, ((0, 0), (0, 0), (0, Fp - Fout)))
        b = jnp.pad(b, ((0, 0), (0, 0), (0, Fp - Fout)))
        add = jnp.pad(add, ((0, 0), (0, 0), (0, Fp - Fout)))

    if vmem_limit_bytes is None:
        vmem_limit_bytes = _default_vmem_limit_bytes()

    w_idx = (lambda s, i, j: (0, 0, j)) if Sw == 1 else (lambda s, i, j: (s, 0, j))
    if Ra == 1:  # compact per-segment/per-batch add, broadcast over rows in-kernel
        add_block, add_idx = (1, 1, tn), (lambda s, i, j: (s, 0, j))
    else:
        add_block, add_idx = (1, tm, tn), (lambda s, i, j: (s, i, j))

    scratch = [pltpu.VMEM((tm, Fin), x_dtype)]          # normalized rows (bf16)
    if mask_rows:
        scratch.append(pltpu.VMEM((tm, 1), jnp.float32))  # keep mask

    grid = (S, Rp // tm, Fp // tn)
    out = pl.pallas_call(
        _make_fused_ln_mm_kernel(mask_rows),
        out_shape=jax.ShapeDtypeStruct((S, Rp, Fp), out_dtype),
        grid_spec=pltpu.PrefetchScalarGridSpec(
            num_scalar_prefetch=0,
            grid=grid,
            in_specs=[
                pl.BlockSpec((1, tm, Fin), lambda s, i, j: (s, i, 0)),  # x rows
                pl.BlockSpec((1, Fin, tn), w_idx),                      # weight
                pl.BlockSpec((1, 1, tn),   w_idx),                      # bias
                pl.BlockSpec(add_block,    add_idx),                    # epilogue add
            ],
            out_specs=pl.BlockSpec((1, tm, tn), lambda s, i, j: (s, i, j)),
            scratch_shapes=scratch,
        ),
        # The Fout axis stays "arbitrary": the LN scratch is written at j == 0
        # and read at j > 0 (cross-j carry), so it must not be sharded across
        # cores.  Megacore parallelism comes from the s / row axes; when
        # tn == Fp (the common case) j has extent 1 anyway.
        compiler_params=pltpu.CompilerParams(
            dimension_semantics=("parallel", "parallel", "arbitrary"),
            vmem_limit_bytes=vmem_limit_bytes),
    )(x, w, b, add)
    return out[:, :R, :Fout]


# ---------------------------------------------------------------------------
# Parameter construction (deterministic, mirrors PyTorch module __init__)
# ---------------------------------------------------------------------------
def sinusoid_encoding_table(n_position, d_hid):
    pos = np.arange(n_position)[:, None].astype(np.float64)
    j = np.arange(d_hid)[None, :]
    angle = pos / np.power(10000.0, 2.0 * (j // 2) / d_hid)
    table = np.zeros((n_position, d_hid), dtype=np.float64)
    table[:, 0::2] = np.sin(angle[:, 0::2])
    table[:, 1::2] = np.cos(angle[:, 1::2])
    return jnp.asarray(table, dtype=jnp.float32)


def _linear_params(key, f_in, f_out):
    kw, kb = jax.random.split(key)
    bound = 1.0 / np.sqrt(f_in)
    w = jax.random.uniform(kw, (f_in, f_out), jnp.float32, -bound, bound)
    b = jax.random.uniform(kb, (f_out,), jnp.float32, -bound, bound)
    return w, b


def _mlp_params(key, f_in, f_out):
    w, b = _linear_params(key, f_in, f_out)
    return {
        "g": jnp.ones((f_in,), jnp.float32),    # LayerNorm weight
        "b": jnp.zeros((f_in,), jnp.float32),   # LayerNorm bias
        "w": w,
        "bias": b,
    }


def make_projector_params(key, f_obj, f_vis, f_txt, f_out):
    keys = jax.random.split(key, 8)
    params = {
        "obj_mlp1": _mlp_params(keys[0], f_obj, f_out),
        "obj_mlp2": _mlp_params(keys[1], f_vis, f_out),
    }
    for i, k in enumerate(TXT_KEYS):
        params[f"txt_mlp1_{k}"] = _mlp_params(keys[2 + 2 * i], f_txt, f_out)
        params[f"txt_mlp2_{k}"] = _mlp_params(keys[3 + 2 * i], f_vis, f_out)
        params[f"txt_pos_{k}"] = sinusoid_encoding_table(_N_PER_KEY[k], f_out)
    return params


def _fold_ln_into_linear(p, param_dtype):
    """(LN(x)*g + b) @ W + bias  ==  normalize(x) @ (g[:,None]*W) + (b @ W + bias)."""
    w = p["w"].astype(jnp.float32)
    w_f = (p["g"].astype(jnp.float32)[:, None] * w).astype(param_dtype)
    b_f = p["b"].astype(jnp.float32) @ w + p["bias"].astype(jnp.float32)
    return w_f, b_f                                    # param_dtype weight, f32 bias


# ---------------------------------------------------------------------------
# Forward (mirrors Projector.forward, Dropout = identity)
# ---------------------------------------------------------------------------
def projector_forward(params, obj, vis_ctx, txt_ctx, *,
                      out_dtype=jnp.bfloat16, param_dtype=jnp.bfloat16):
    B, N_obj, f_obj = obj.shape
    f_out = params["obj_mlp1"]["w"].shape[1]

    # ---- img branch: 4 heads = one LN + one concatenated (f_vis, 4*f_out)
    # GEMM over only B rows -> plain XLA (f32), no pallas-call overhead, no
    # extra HBM round-trip; result feeds the token kernels' epilogues.
    img_heads = ["obj_mlp2"] + [f"txt_mlp2_{k}" for k in TXT_KEYS]
    folded = [_fold_ln_into_linear(params[h], jnp.float32) for h in img_heads]
    w_img = jnp.concatenate([f[0] for f in folded], axis=1)        # (f_vis, 4*f_out)
    b_img = jnp.concatenate([f[1] for f in folded], axis=0)        # (4*f_out,)
    v = vis_ctx.astype(jnp.float32)
    mu = jnp.mean(v, -1, keepdims=True)
    var = jnp.mean(jnp.square(v - mu), -1, keepdims=True)
    vn = (v - mu) * lax.rsqrt(var + LN_EPS)
    img_out = (vn @ w_img + b_img).reshape(B, 4, f_out)            # f32

    # ---- obj tokens: one call, zero-row masking, compact per-batch img add ----
    w_obj, b_obj = _fold_ln_into_linear(params["obj_mlp1"], param_dtype)
    obj_embed = fused_ln_linear(
        obj,                                           # (B, N_obj, f_obj)
        w_obj[None],                                   # (1, f_obj, f_out) shared
        b_obj[None, None, :],                          # (1, 1, f_out)
        img_out[:, 0:1, :].astype(jnp.bfloat16),       # (B, 1, f_out) compact add
        mask_rows=True, out_dtype=out_dtype)           # (B, N_obj, f_out)

    # ---- txt tokens: 3 small segments grouped in ONE call, padded only up to
    # n_max = 9 rows per batch (never up to N_obj) ----
    n_max = max(_N_PER_KEY.values())
    xs, adds, ws, bs = [], [], [], []
    for h, k in enumerate(TXT_KEYS, start=1):
        ek = txt_ctx[k]["embed"]                       # (B, n_k, f_txt)
        pos_k = txt_ctx[k]["pos"]                      # (B, n_k) int32
        n_k = ek.shape[1]
        pe = jnp.take(params[f"txt_pos_{k}"], pos_k, axis=0)       # (B, n_k, f_out)
        add_k = img_out[:, h:h + 1, :] + pe                        # (B, n_k, f_out)
        xs.append(jnp.pad(ek, ((0, 0), (0, n_max - n_k), (0, 0))))
        adds.append(jnp.pad(add_k, ((0, 0), (0, n_max - n_k), (0, 0))))
        wf, bf_ = _fold_ln_into_linear(params[f"txt_mlp1_{k}"], param_dtype)
        ws.append(wf)
        bs.append(bf_)
    f_txt = xs[0].shape[-1]
    x_txt = jnp.stack(xs).reshape(3, B * n_max, f_txt)
    add_txt = jnp.stack(adds).reshape(3, B * n_max, f_out).astype(jnp.bfloat16)
    w_txt = jnp.stack(ws)                              # (3, f_txt, f_out)
    b_txt = jnp.stack(bs)[:, None, :]                  # (3, 1, f_out)
    txt_out = fused_ln_linear(
        x_txt, w_txt, b_txt, add_txt,
        mask_rows=False, out_dtype=out_dtype)          # (3, B*n_max, f_out)
    txt_out = txt_out.reshape(3, B, n_max, f_out)

    # reassemble in torch.cat order: [obj, whole, five, nine]
    pieces = [obj_embed]
    for h, k in enumerate(TXT_KEYS):
        pieces.append(txt_out[h, :, :_N_PER_KEY[k], :])
    return jnp.concatenate(pieces, axis=1)             # (B, N_obj + 15, f_out)


# ---------------------------------------------------------------------------
# Pure-JAX f32 reference (for a tolerance check only)
# ---------------------------------------------------------------------------
def projector_reference(params, obj, vis_ctx, txt_ctx):
    def mlp(p, x):
        mu = jnp.mean(x, -1, keepdims=True)
        var = jnp.mean(jnp.square(x - mu), -1, keepdims=True)
        xn = (x - mu) / jnp.sqrt(var + LN_EPS)
        return (xn * p["g"] + p["b"]) @ p["w"] + p["bias"]

    img = vis_ctx[:, None, :]
    obj_mask = jnp.sum(jnp.abs(obj), -1) == 0
    obj_embed = mlp(params["obj_mlp1"], obj) + mlp(params["obj_mlp2"], img)
    obj_embed = jnp.where(obj_mask[..., None], 0.0, obj_embed)
    out = [obj_embed]
    for k in TXT_KEYS:
        pe = jnp.take(params[f"txt_pos_{k}"], txt_ctx[k]["pos"], axis=0)
        out.append(mlp(params[f"txt_mlp1_{k}"], txt_ctx[k]["embed"])
                   + mlp(params[f"txt_mlp2_{k}"], img) + pe)
    return jnp.concatenate(out, axis=1)


# ---------------------------------------------------------------------------
if __name__ == "__main__":
    B, N_obj = 2, 8
    f_obj = f_vis = f_txt = f_out = 32

    key = jax.random.PRNGKey(0)
    k_param, k_obj, k_vis, k_w, k_f, k_n = jax.random.split(key, 6)

    params = make_projector_params(k_param, f_obj, f_vis, f_txt, f_out)

    obj = jax.random.normal(k_obj, (B, N_obj, f_obj), jnp.float32)
    obj = obj.at[:, -2:, :].set(0.0)                 # exercise the zero-row mask
    vis_ctx = jax.random.normal(k_vis, (B, f_vis), jnp.float32)

    txt_ctx = {
        "whole": {"pos": jnp.tile(jnp.arange(1, dtype=jnp.int32), (B, 1)),
                  "embed": jax.random.normal(k_w, (B, 1, f_txt), jnp.float32)},
        "five":  {"pos": jnp.tile(jnp.arange(5, dtype=jnp.int32), (B, 1)),
                  "embed": jax.random.normal(k_f, (B, 5, f_txt), jnp.float32)},
        "nine":  {"pos": jnp.tile(jnp.arange(9, dtype=jnp.int32), (B, 1)),
                  "embed": jax.random.normal(k_n, (B, 9, f_txt), jnp.float32)},
    }

    fwd = jax.jit(projector_forward)
    out = jax.block_until_ready(fwd(params, obj, vis_ctx, txt_ctx))

    assert out.shape == (B, N_obj + 1 + 5 + 9, f_out), out.shape
    # masked (all-zero) object rows must be exactly zero
    assert bool(jnp.all(out[:, N_obj - 2:N_obj, :] == 0.0))
    # tolerance check vs pure-JAX f32 reference (kernel uses bf16 MXU operands)
    ref = projector_reference(params, obj, vis_ctx, txt_ctx)
    err = jnp.max(jnp.abs(out.astype(jnp.float32) - ref))
    assert bool(jnp.allclose(out.astype(jnp.float32), ref, atol=1e-1, rtol=1e-1)), float(err)

    print("KERNEL_OK")
</pallas_src>

<mosaic_0001>
module attributes {stable_mosaic.version = 11 : i64} {
  func.func @kernel(%arg0: i32, %arg1: i32, %arg2: i32, %arg3: memref<1x32x32xbf16, #tpu.memory_space<vmem>>, %arg4: memref<1x32x128xbf16, #tpu.memory_space<vmem>>, %arg5: memref<1x1x128xf32, #tpu.memory_space<vmem>>, %arg6: memref<1x32x128xbf16, #tpu.memory_space<vmem>>, %arg7: memref<1x32x128xbf16, #tpu.memory_space<vmem>>, %arg8: memref<32x32xbf16, #tpu.memory_space<vmem>>) attributes {dimension_semantics = [#tpu.dimension_semantics<parallel>, #tpu.dimension_semantics<parallel>, #tpu.dimension_semantics<arbitrary>], iteration_bounds = array<i64: 3, 1, 1>, scalar_prefetch = 0 : i64, scratch_operands = 1 : i64, tpu.core_type = #tpu.core_type<tc>, window_params = [{transform_indices = @transform_0, window_bounds = array<i64: 1, 32, 32>}, {transform_indices = @transform_1, window_bounds = array<i64: 1, 32, 128>}, {transform_indices = @transform_2, window_bounds = array<i64: 1, 1, 128>}, {transform_indices = @transform_3, window_bounds = array<i64: 1, 32, 128>}, {transform_indices = @transform_4, window_bounds = array<i64: 1, 32, 128>}]} {
    %c0_i32 = arith.constant 0 : i32
    %0 = arith.cmpi eq, %arg2, %c0_i32 : i32
    %1 = arith.extui %0 : i1 to i32
    %c0_i32_0 = arith.constant 0 : i32
    %2 = arith.cmpi ne, %1, %c0_i32_0 : i32
    scf.if %2 {
      %c0_14 = arith.constant 0 : index
      %c0_15 = arith.constant 0 : index
      %c0_16 = arith.constant 0 : index
      %19 = vector.load %arg3[%c0_14, %c0_15, %c0_16] : memref<1x32x32xbf16, #tpu.memory_space<vmem>>, vector<1x32x32xbf16>
      %20 = vector.shape_cast %19 : vector<1x32x32xbf16> to vector<32x32xbf16>
      %21 = arith.extf %20 : vector<32x32xbf16> to vector<32x32xf32>
      %cst_17 = arith.constant dense<0.000000e+00> : vector<32xf32>
      %22 = vector.multi_reduction <add>, %21, %cst_17 [1] : vector<32x32xf32> to vector<32xf32>
      %23 = vector.shape_cast %22 : vector<32xf32> to vector<32x1xf32>
      %cst_18 = arith.constant 3.200000e+01 : f32
      %24 = vector.broadcast %cst_18 : f32 to vector<32x1xf32>
      %25 = arith.divf %23, %24 : vector<32x1xf32>
      %26 = vector.broadcast %25 : vector<32x1xf32> to vector<32x32xf32>
      %27 = arith.subf %21, %26 : vector<32x32xf32>
      %28 = arith.mulf %27, %27 : vector<32x32xf32>
      %cst_19 = arith.constant dense<0.000000e+00> : vector<32xf32>
      %29 = vector.multi_reduction <add>, %28, %cst_19 [1] : vector<32x32xf32> to vector<32xf32>
      %30 = vector.shape_cast %29 : vector<32xf32> to vector<32x1xf32>
      %cst_20 = arith.constant 3.200000e+01 : f32
      %31 = vector.broadcast %cst_20 : f32 to vector<32x1xf32>
      %32 = arith.divf %30, %31 : vector<32x1xf32>
      %33 = vector.broadcast %25 : vector<32x1xf32> to vector<32x32xf32>
      %34 = arith.subf %21, %33 : vector<32x32xf32>
      %cst_21 = arith.constant 9.99999974E-6 : f32
      %35 = vector.broadcast %cst_21 : f32 to vector<32x1xf32>
      %36 = arith.addf %32, %35 : vector<32x1xf32>
      %37 = math.rsqrt %36 : vector<32x1xf32>
      %38 = vector.broadcast %37 : vector<32x1xf32> to vector<32x32xf32>
      %39 = arith.mulf %34, %38 : vector<32x32xf32>
      %40 = arith.truncf %39 : vector<32x32xf32> to vector<32x32xbf16>
      %c0_22 = arith.constant 0 : index
      %c0_23 = arith.constant 0 : index
      %41 = vector.load %arg8[%c0_22, %c0_23] : memref<32x32xbf16, #tpu.memory_space<vmem>>, vector<32x32xbf16>
      tpu.vector_store %arg8[%c0_22, %c0_23], %40 {strides = array<i32>} : memref<32x32xbf16, #tpu.memory_space<vmem>>, vector<32x32xbf16>,
    } else {
    }
    %c0 = arith.constant 0 : index
    %c0_1 = arith.constant 0 : index
    %3 = vector.load %arg8[%c0, %c0_1] : memref<32x32xbf16, #tpu.memory_space<vmem>>, vector<32x32xbf16>
    %c0_2 = arith.constant 0 : index
    %c0_3 = arith.constant 0 : index
    %c0_4 = arith.constant 0 : index
    %4 = vector.load %arg4[%c0_2, %c0_3, %c0_4] : memref<1x32x128xbf16, #tpu.memory_space<vmem>>, vector<1x32x128xbf16>
    %5 = vector.shape_cast %4 : vector<1x32x128xbf16> to vector<32x128xbf16>
    %cst = arith.constant dense<0.000000e+00> : vector<32x128xf32>
    %6 = tpu.matmul %3, %5, %cst {dimension_numbers = #tpu.dot_dimension_numbers<[1], [0], [0], [1], [0, 0, 1, 1], [], []>} : vector<32x32xbf16>, vector<32x128xbf16>, vector<32x128xf32> -> vector<32x128xf32>
    %c0_5 = arith.constant 0 : index
    %c0_6 = arith.constant 0 : index
    %c0_7 = arith.constant 0 : index
    %7 = vector.load %arg5[%c0_5, %c0_6, %c0_7] : memref<1x1x128xf32, #tpu.memory_space<vmem>>, vector<1x1x128xf32>
    %8 = vector.shape_cast %7 : vector<1x1x128xf32> to vector<1x128xf32>
    %9 = vector.broadcast %8 : vector<1x128xf32> to vector<32x128xf32>
    %10 = arith.addf %6, %9 : vector<32x128xf32>
    %c0_8 = arith.constant 0 : index
    %c0_9 = arith.constant 0 : index
    %c0_10 = arith.constant 0 : index
    %11 = vector.load %arg6[%c0_8, %c0_9, %c0_10] : memref<1x32x128xbf16, #tpu.memory_space<vmem>>, vector<1x32x128xbf16>
    %12 = vector.shape_cast %11 : vector<1x32x128xbf16> to vector<32x128xbf16>
    %13 = arith.extf %12 : vector<32x128xbf16> to vector<32x128xf32>
    %14 = arith.addf %10, %13 : vector<32x128xf32>
    %15 = arith.truncf %14 : vector<32x128xf32> to vector<32x128xbf16>
    %c0_11 = arith.constant 0 : index
    %c0_12 = arith.constant 0 : index
    %c0_13 = arith.constant 0 : index
    %16 = vector.load %arg7[%c0_11, %c0_12, %c0_13] : memref<1x32x128xbf16, #tpu.memory_space<vmem>>, vector<1x32x128xbf16>
    %17 = vector.shape_cast %16 : vector<1x32x128xbf16> to vector<32x128xbf16>
    %18 = vector.shape_cast %15 : vector<32x128xbf16> to vector<1x32x128xbf16>
    tpu.vector_store %arg7[%c0_11, %c0_12, %c0_13], %18 {strides = array<i32>} : memref<1x32x128xbf16, #tpu.memory_space<vmem>>, vector<1x32x128xbf16>,
    return
  }
  func.func @transform_0(%arg0: i32, %arg1: i32, %arg2: i32) -> (i32, i32, i32) {
    %c0_i32 = arith.constant 0 : i32
    %c0_i32_0 = arith.constant 0 : i32
    return %arg0, %arg1, %c0_i32 : i32, i32, i32
  }
  func.func @transform_1(%arg0: i32, %arg1: i32, %arg2: i32) -> (i32, i32, i32) {
    %c0_i32 = arith.constant 0 : i32
    %c0_i32_0 = arith.constant 0 : i32
    return %arg0, %c0_i32, %arg2 : i32, i32, i32
  }
  func.func @transform_2(%arg0: i32, %arg1: i32, %arg2: i32) -> (i32, i32, i32) {
    %c0_i32 = arith.constant 0 : i32
    %c0_i32_0 = arith.constant 0 : i32
    return %arg0, %c0_i32, %arg2 : i32, i32, i32
  }
  func.func @transform_3(%arg0: i32, %arg1: i32, %arg2: i32) -> (i32, i32, i32) {
    %c0_i32 = arith.constant 0 : i32
    return %arg0, %arg1, %arg2 : i32, i32, i32
  }
  func.func @transform_4(%arg0: i32, %arg1: i32, %arg2: i32) -> (i32, i32, i32) {
    %c0_i32 = arith.constant 0 : i32
    return %arg0, %arg1, %arg2 : i32, i32, i32
  }
}

module attributes {stable_mosaic.version = 11 : i64} {
  func.func @kernel(%arg0: i32, %arg1: i32, %arg2: i32, %arg3: memref<1x16x32xbf16, #tpu.memory_space<vmem>>, %arg4: memref<1x32x128xbf16, #tpu.memory_space<vmem>>, %arg5: memref<1x1x128xf32, #tpu.memory_space<vmem>>, %arg6: memref<1x1x128xbf16, #tpu.memory_space<vmem>>, %arg7: memref<1x16x128xbf16, #tpu.memory_space<vmem>>, %arg8: memref<16x32xbf16, #tpu.memory_space<vmem>>, %arg9: memref<16x1xf32, #tpu.memory_space<vmem>>) attributes {dimension_semantics = [#tpu.dimension_semantics<parallel>, #tpu.dimension_semantics<parallel>, #tpu.dimension_semantics<arbitrary>], iteration_bounds = array<i64: 2, 1, 1>, scalar_prefetch = 0 : i64, scratch_operands = 2 : i64, tpu.core_type = #tpu.core_type<tc>, window_params = [{transform_indices = @transform_0, window_bounds = array<i64: 1, 16, 32>}, {transform_indices = @transform_1, window_bounds = array<i64: 1, 32, 128>}, {transform_indices = @transform_2, window_bounds = array<i64: 1, 1, 128>}, {transform_indices = @transform_3, window_bounds = array<i64: 1, 1, 128>}, {transform_indices = @transform_4, window_bounds = array<i64: 1, 16, 128>}]} {
    %c0_i32 = arith.constant 0 : i32
    %0 = arith.cmpi eq, %arg2, %c0_i32 : i32
    %1 = arith.extui %0 : i1 to i32
    %c0_i32_0 = arith.constant 0 : i32
    %2 = arith.cmpi ne, %1, %c0_i32_0 : i32
    scf.if %2 {
      %c0_16 = arith.constant 0 : index
      %c0_17 = arith.constant 0 : index
      %c0_18 = arith.constant 0 : index
      %23 = vector.load %arg3[%c0_16, %c0_17, %c0_18] : memref<1x16x32xbf16, #tpu.memory_space<vmem>>, vector<1x16x32xbf16>
      %24 = vector.shape_cast %23 : vector<1x16x32xbf16> to vector<16x32xbf16>
      %25 = arith.extf %24 : vector<16x32xbf16> to vector<16x32xf32>
      %cst_19 = arith.constant dense<0.000000e+00> : vector<16xf32>
      %26 = vector.multi_reduction <add>, %25, %cst_19 [1] : vector<16x32xf32> to vector<16xf32>
      %27 = vector.shape_cast %26 : vector<16xf32> to vector<16x1xf32>
      %cst_20 = arith.constant 3.200000e+01 : f32
      %28 = vector.broadcast %cst_20 : f32 to vector<16x1xf32>
      %29 = arith.divf %27, %28 : vector<16x1xf32>
      %30 = vector.broadcast %29 : vector<16x1xf32> to vector<16x32xf32>
      %31 = arith.subf %25, %30 : vector<16x32xf32>
      %32 = arith.mulf %31, %31 : vector<16x32xf32>
      %cst_21 = arith.constant dense<0.000000e+00> : vector<16xf32>
      %33 = vector.multi_reduction <add>, %32, %cst_21 [1] : vector<16x32xf32> to vector<16xf32>
      %34 = vector.shape_cast %33 : vector<16xf32> to vector<16x1xf32>
      %cst_22 = arith.constant 3.200000e+01 : f32
      %35 = vector.broadcast %cst_22 : f32 to vector<16x1xf32>
      %36 = arith.divf %34, %35 : vector<16x1xf32>
      %37 = vector.broadcast %29 : vector<16x1xf32> to vector<16x32xf32>
      %38 = arith.subf %25, %37 : vector<16x32xf32>
      %cst_23 = arith.constant 9.99999974E-6 : f32
      %39 = vector.broadcast %cst_23 : f32 to vector<16x1xf32>
      %40 = arith.addf %36, %39 : vector<16x1xf32>
      %41 = math.rsqrt %40 : vector<16x1xf32>
      %42 = vector.broadcast %41 : vector<16x1xf32> to vector<16x32xf32>
      %43 = arith.mulf %38, %42 : vector<16x32xf32>
      %44 = arith.truncf %43 : vector<16x32xf32> to vector<16x32xbf16>
      %c0_24 = arith.constant 0 : index
      %c0_25 = arith.constant 0 : index
      %45 = vector.load %arg8[%c0_24, %c0_25] : memref<16x32xbf16, #tpu.memory_space<vmem>>, vector<16x32xbf16>
      tpu.vector_store %arg8[%c0_24, %c0_25], %44 {strides = array<i32>} : memref<16x32xbf16, #tpu.memory_space<vmem>>, vector<16x32xbf16>,
      %46 = math.absf %25 : vector<16x32xf32>
      %cst_26 = arith.constant dense<0.000000e+00> : vector<16xf32>
      %47 = vector.multi_reduction <add>, %46, %cst_26 [1] : vector<16x32xf32> to vector<16xf32>
      %48 = vector.shape_cast %47 : vector<16xf32> to vector<16x1xf32>
      %cst_27 = arith.constant 0.000000e+00 : f32
      %49 = vector.broadcast %cst_27 : f32 to vector<16x1xf32>
      %50 = arith.cmpf one, %48, %49 : vector<16x1xf32>
      %51 = arith.extui %50 : vector<16x1xi1> to vector<16x1xi32>
      %52 = arith.sitofp %51 : vector<16x1xi32> to vector<16x1xf32>
      %c0_28 = arith.constant 0 : index
      %c0_29 = arith.constant 0 : index
      %53 = vector.load %arg9[%c0_28, %c0_29] : memref<16x1xf32, #tpu.memory_space<vmem>>, vector<16x1xf32>
      tpu.vector_store %arg9[%c0_28, %c0_29], %52 {strides = array<i32>} : memref<16x1xf32, #tpu.memory_space<vmem>>, vector<16x1xf32>,
    } else {
    }
    %c0 = arith.constant 0 : index
    %c0_1 = arith.constant 0 : index
    %3 = vector.load %arg8[%c0, %c0_1] : memref<16x32xbf16, #tpu.memory_space<vmem>>, vector<16x32xbf16>
    %c0_2 = arith.constant 0 : index
    %c0_3 = arith.constant 0 : index
    %c0_4 = arith.constant 0 : index
    %4 = vector.load %arg4[%c0_2, %c0_3, %c0_4] : memref<1x32x128xbf16, #tpu.memory_space<vmem>>, vector<1x32x128xbf16>
    %5 = vector.shape_cast %4 : vector<1x32x128xbf16> to vector<32x128xbf16>
    %cst = arith.constant dense<0.000000e+00> : vector<16x128xf32>
    %6 = tpu.matmul %3, %5, %cst {dimension_numbers = #tpu.dot_dimension_numbers<[1], [0], [0], [1], [0, 0, 1, 1], [], []>} : vector<16x32xbf16>, vector<32x128xbf16>, vector<16x128xf32> -> vector<16x128xf32>
    %c0_5 = arith.constant 0 : index
    %c0_6 = arith.constant 0 : index
    %c0_7 = arith.constant 0 : index
    %7 = vector.load %arg5[%c0_5, %c0_6, %c0_7] : memref<1x1x128xf32, #tpu.memory_space<vmem>>, vector<1x1x128xf32>
    %8 = vector.shape_cast %7 : vector<1x1x128xf32> to vector<1x128xf32>
    %9 = vector.broadcast %8 : vector<1x128xf32> to vector<16x128xf32>
    %10 = arith.addf %6, %9 : vector<16x128xf32>
    %c0_8 = arith.constant 0 : index
    %c0_9 = arith.constant 0 : index
    %c0_10 = arith.constant 0 : index
    %11 = vector.load %arg6[%c0_8, %c0_9, %c0_10] : memref<1x1x128xbf16, #tpu.memory_space<vmem>>, vector<1x1x128xbf16>
    %12 = vector.shape_cast %11 : vector<1x1x128xbf16> to vector<1x128xbf16>
    %13 = arith.extf %12 : vector<1x128xbf16> to vector<1x128xf32>
    %14 = vector.broadcast %13 : vector<1x128xf32> to vector<16x128xf32>
    %15 = arith.addf %10, %14 : vector<16x128xf32>
    %c0_11 = arith.constant 0 : index
    %c0_12 = arith.constant 0 : index
    %16 = vector.load %arg9[%c0_11, %c0_12] : memref<16x1xf32, #tpu.memory_space<vmem>>, vector<16x1xf32>
    %17 = vector.broadcast %16 : vector<16x1xf32> to vector<16x128xf32>
    %18 = arith.mulf %15, %17 : vector<16x128xf32>
    %19 = arith.truncf %18 : vector<16x128xf32> to vector<16x128xbf16>
    %c0_13 = arith.constant 0 : index
    %c0_14 = arith.constant 0 : index
    %c0_15 = arith.constant 0 : index
    %20 = vector.load %arg7[%c0_13, %c0_14, %c0_15] : memref<1x16x128xbf16, #tpu.memory_space<vmem>>, vector<1x16x128xbf16>
    %21 = vector.shape_cast %20 : vector<1x16x128xbf16> to vector<16x128xbf16>
    %22 = vector.shape_cast %19 : vector<16x128xbf16> to vector<1x16x128xbf16>
    tpu.vector_store %arg7[%c0_13, %c0_14, %c0_15], %22 {strides = array<i32>} : memref<1x16x128xbf16, #tpu.memory_space<vmem>>, vector<1x16x128xbf16>,
    return
  }
  func.func @transform_0(%arg0: i32, %arg1: i32, %arg2: i32) -> (i32, i32, i32) {
    %c0_i32 = arith.constant 0 : i32
    %c0_i32_0 = arith.constant 0 : i32
    return %arg0, %arg1, %c0_i32 : i32, i32, i32
  }
  func.func @transform_1(%arg0: i32, %arg1: i32, %arg2: i32) -> (i32, i32, i32) {
    %c0_i32 = arith.constant 0 : i32
    %c0_i32_0 = arith.constant 0 : i32
    %c0_i32_1 = arith.constant 0 : i32
    return %c0_i32, %c0_i32_0, %arg2 : i32, i32, i32
  }
  func.func @transform_2(%arg0: i32, %arg1: i32, %arg2: i32) -> (i32, i32, i32) {
    %c0_i32 = arith.constant 0 : i32
    %c0_i32_0 = arith.constant 0 : i32
    %c0_i32_1 = arith.constant 0 : i32
    return %c0_i32, %c0_i32_0, %arg2 : i32, i32, i32
  }
  func.func @transform_3(%arg0: i32, %arg1: i32, %arg2: i32) -> (i32, i32, i32) {
    %c0_i32 = arith.constant 0 : i32
    %c0_i32_0 = arith.constant 0 : i32
    return %arg0, %c0_i32, %arg2 : i32, i32, i32
  }
  func.func @transform_4(%arg0: i32, %arg1: i32, %arg2: i32) -> (i32, i32, i32) {
    %c0_i32 = arith.constant 0 : i32
    return %arg0, %arg1, %arg2 : i32, i32, i32
  }
}

</mosaic_0001>

<llo_original>
// kernel: projector_forward.3
$region0: #{projector_forward.3}
  #allocation0 [shape = 'u32[]', space=smem, size = 0x4, offset = 0x4, fixed_abs, tag = 'smem constant byte address 0x4 - core index']
  #allocation1 [shape = 'u32[144,128]{1,0:T(1,128)}', space=vmem, size = 0x12000, scoped, tag = 'internal scratch']
  #allocation2 [shape = 'bf16[32,32]{1,0:T(16,128)(2,1)}', space=vmem, size = 0x2000, scoped, tag = 'scratch operand']
  %s0 = inlined_call_operand.hbm [shape: bf16[3,32,32], index: 0, kind: input, shape index: {}]
  %s1 = inlined_call_operand.hbm [shape: bf16[3,32,128], index: 1, kind: input, shape index: {}]
  %s2 = inlined_call_operand.hbm [shape: f32[3,1,128], index: 2, kind: input, shape index: {}]
  %s3 = inlined_call_operand.hbm [shape: bf16[3,32,128], index: 3, kind: input, shape index: {}]
  %s4 = inlined_call_operand.hbm [shape: bf16[3,32,128], index: 4, kind: output, shape index: {}]
  %s5 = sld [smem:[#allocation0]]
  $region69: #{projector_forward.3} parent=0
    _
  %s7 = ssub.s32 1, %s5
  %s8 = scalar_select 0, %s7, %s5
  $region1: #{projector_forward.3} parent=0
    #allocation3 [shape = 'u8[16384]{0}', space=vmem, size = 0x4000, scoped, tag = 'input window, operand 0']
    #allocation4 [shape = 's32[2]{0}', space=sflag, size = 0x8, scoped, tag = 'scoped memory for projector_forward.3']
    #allocation5 [shape = 's32[2]{0}', space=sflag, size = 0x8, scoped, tag = 'scoped memory for projector_forward.3']
    #allocation6 [shape = 'u8[16384]{0}', space=vmem, size = 0x4000, scoped, tag = 'input window, operand 1']
    #allocation7 [shape = 's32[2]{0}', space=sflag, size = 0x8, scoped, tag = 'scoped memory for projector_forward.3']
    #allocation8 [shape = 'u8[1024]{0}', space=vmem, size = 0x400, scoped, tag = 'input window, operand 2']
    #allocation9 [shape = 'u8[16384]{0}', space=vmem, size = 0x4000, scoped, tag = 'input window, operand 3']
    #allocation10 [shape = 's32[2]{0}', space=sflag, size = 0x8, scoped, tag = 'scoped memory for projector_forward.3']
    #allocation11 [shape = 'u8[16384]{0}', space=vmem, size = 0x4000, scoped, tag = 'output window, operand 0']
    %9 = vsyncpa [#allocation4], 0
    %s10 = scalar_lea.sflag [#allocation4], 1
    %11 = vsyncpa %s10, 0
    %12 = vsyncpa [#allocation7], 0
    %s13 = scalar_lea.sflag [#allocation7], 1
    %14 = vsyncpa %s13, 0
    %15 = vsyncpa [#allocation10], 0
    %s16 = scalar_lea.sflag [#allocation10], 1
    %17 = vsyncpa %s16, 0
    %18 = vsyncpa [#allocation5], 0
    %s19 = scalar_lea.sflag [#allocation5], 1
    %20 = vsyncpa %s19, 0
    loop: start=0, step=1, limit=5
    $region2: #{projector_forward.3} parent=1 // loop_pre_header
      _
    $region3: #{projector_forward.3} parent=1 // loop_header
      %s22 = sphi 0, %s26
      %p23 = scmp.ge.s32.totalorder %s22, 5
      %s29 = sphi 0, %s48
      %s30 = sphi 0, %s44
      %s31 = sphi 0, %s40
      %s32 = sphi 0, %s29
      %s33 = sphi 0, %s30
      %s34 = sphi 0, %s31
      %s35 = sphi 0, %s32
      %s36 = sphi 0, %s33
      %s37 = sphi 0, %s34
      %s53 = sphi 0, %s55
      %s56 = sphi 0, %s53
      %s57 = sphi 0, %s56
      %s73 = sphi 0, %s57
      %s81 = sphi 0, %s83
      %s84 = sphi 0, %s81
      %s85 = sphi 0, %s84
      %s101 = sphi 0, %s85
      %s109 = sphi 0, %s111
      %s112 = sphi 0, %s109
      %s113 = sphi 0, %s112
      %s129 = sphi 0, %s113
      %s139 = sphi 0, %s141
      %s142 = sphi 0, %s139
      %s143 = sphi 0, %s142
      %s159 = sphi 0, %s143
      %s169 = sphi 0, %s171
      %s172 = sphi 0, %s169
      %s173 = sphi 0, %s172
      %s189 = sphi 0, %s173
    $region4: #{projector_forward.3} parent=1 // loop_header_branch
      %25 = sbr.rel (%p23) target = $region8
    $region5: #{projector_forward.3} parent=1 // loop_body
      %s27 = ssub.s32 %s22, 1
      %s28 = ssub.s32 %s22, 2
      %s38 = sadd.s32 1, %s31
      %p39 = scmp.ge.s32.totalorder %s38, 1
      %s40 = scalar_select %p39, 0, %s38
      %s41 = sadd.s32 1, %s30
      %s42 = scalar_select %p39, %s41, %s30
      %p43 = scmp.ge.s32.totalorder %s42, 1
      %s44 = scalar_select %p43, 0, %s42
      %s45 = sadd.s32 1, %s29
      %s46 = scalar_select %p43, %s45, %s29
      %p47 = scmp.ge.s32.totalorder %s46, 3
      %s48 = scalar_select %p47, 0, %s46
      %s49 = ssub.s32 %s29, %s48
      %s50 = ssub.s32 %s30, %s44
      %s51 = sor.u32 %s49, %s50
      %p52 = scmp.eq.s32.totalorder %s51, 0
      %s54 = sadd.s32 %s53, 1
      %s55 = scalar_select %p52, %s53, %s54
      %p58 = pneg %p52
      %p59 = scmp.eq.s32.totalorder %s22, 2
      %p60 = por %p58, %p59
      %p61 = scmp.ne.s32.totalorder %s53, %s56
      %p62 = scmp.eq.s32.totalorder %s22, 0
      %p63 = por %p61, %p62
      %p64 = scmp.ne.s32.totalorder %s53, %s56
      %p65 = scmp.eq.s32.totalorder %s27, 2
      %p66 = por %p64, %p65
      %p67 = scmp.ne.s32.totalorder %s56, %s57
      %p68 = scmp.eq.s32.totalorder %s27, 0
      %p69 = por %p67, %p68
      %p70 = scmp.ne.s32.totalorder %s56, %s57
      %p71 = scmp.eq.s32.totalorder %s28, 2
      %p72 = por %p70, %p71
      %p74 = scmp.ne.s32.totalorder %s57, %s73
      %p75 = scmp.eq.s32.totalorder %s28, 0
      %p76 = por %p74, %p75
      %s77 = ssub.s32 %s29, %s48
      %s78 = ssub.s32 %s31, %s40
      %s79 = sor.u32 %s77, %s78
      %p80 = scmp.eq.s32.totalorder %s79, 0
      %s82 = sadd.s32 %s81, 1
      %s83 = scalar_select %p80, %s81, %s82
      %p86 = pneg %p80
      %p87 = scmp.eq.s32.totalorder %s22, 2
      %p88 = por %p86, %p87
      %p89 = scmp.ne.s32.totalorder %s81, %s84
      %p90 = scmp.eq.s32.totalorder %s22, 0
      %p91 = por %p89, %p90
      %p92 = scmp.ne.s32.totalorder %s81, %s84
      %p93 = scmp.eq.s32.totalorder %s27, 2
      %p94 = por %p92, %p93
      %p95 = scmp.ne.s32.totalorder %s84, %s85
      %p96 = scmp.eq.s32.totalorder %s27, 0
      %p97 = por %p95, %p96
      %p98 = scmp.ne.s32.totalorder %s84, %s85
      %p99 = scmp.eq.s32.totalorder %s28, 2
      %p100 = por %p98, %p99
      %p102 = scmp.ne.s32.totalorder %s85, %s101
      %p103 = scmp.eq.s32.totalorder %s28, 0
      %p104 = por %p102, %p103
      %s105 = ssub.s32 %s29, %s48
      %s106 = ssub.s32 %s31, %s40
      %s107 = sor.u32 %s105, %s106
      %p108 = scmp.eq.s32.totalorder %s107, 0
      %s110 = sadd.s32 %s109, 1
      %s111 = scalar_select %p108, %s109, %s110
      %p114 = pneg %p108
      %p115 = scmp.eq.s32.totalorder %s22, 2
      %p116 = por %p114, %p115
      %p117 = scmp.ne.s32.totalorder %s109, %s112
      %p118 = scmp.eq.s32.totalorder %s22, 0
      %p119 = por %p117, %p118
      %p120 = scmp.ne.s32.totalorder %s109, %s112
      %p121 = scmp.eq.s32.totalorder %s27, 2
      %p122 = por %p120, %p121
      %p123 = scmp.ne.s32.totalorder %s112, %s113
      %p124 = scmp.eq.s32.totalorder %s27, 0
      %p125 = por %p123, %p124
      %p126 = scmp.ne.s32.totalorder %s112, %s113
      %p127 = scmp.eq.s32.totalorder %s28, 2
      %p128 = por %p126, %p127
      %p130 = scmp.ne.s32.totalorder %s113, %s129
      %p131 = scmp.eq.s32.totalorder %s28, 0
      %p132 = por %p130, %p131
      %s133 = ssub.s32 %s29, %s48
      %s134 = ssub.s32 %s30, %s44
      %s135 = sor.u32 %s133, %s134
      %s136 = ssub.s32 %s31, %s40
      %s137 = sor.u32 %s135, %s136
      %p138 = scmp.eq.s32.totalorder %s137, 0
      %s140 = sadd.s32 %s139, 1
      %s141 = scalar_select %p138, %s139, %s140
      %p144 = pneg %p138
      %p145 = scmp.eq.s32.totalorder %s22, 2
      %p146 = por %p144, %p145
      %p147 = scmp.ne.s32.totalorder %s139, %s142
      %p148 = scmp.eq.s32.totalorder %s22, 0
      %p149 = por %p147, %p148
      %p150 = scmp.ne.s32.totalorder %s139, %s142
      %p151 = scmp.eq.s32.totalorder %s27, 2
      %p152 = por %p150, %p151
      %p153 = scmp.ne.s32.totalorder %s142, %s143
      %p154 = scmp.eq.s32.totalorder %s27, 0
      %p155 = por %p153, %p154
      %p156 = scmp.ne.s32.totalorder %s142, %s143
      %p157 = scmp.eq.s32.totalorder %s28, 2
      %p158 = por %p156, %p157
      %p160 = scmp.ne.s32.totalorder %s143, %s159
      %p161 = scmp.eq.s32.totalorder %s28, 0
      %p162 = por %p160, %p161
      %s163 = ssub.s32 %s29, %s48
      %s164 = ssub.s32 %s30, %s44
      %s165 = sor.u32 %s163, %s164
      %s166 = ssub.s32 %s31, %s40
      %s167 = sor.u32 %s165, %s166
      %p168 = scmp.eq.s32.totalorder %s167, 0
      %s170 = sadd.s32 %s169, 1
      %s171 = scalar_select %p168, %s169, %s170
      %p174 = pneg %p168
      %p175 = scmp.eq.s32.totalorder %s22, 2
      %p176 = por %p174, %p175
      %p177 = scmp.ne.s32.totalorder %s169, %s172
      %p178 = scmp.eq.s32.totalorder %s22, 0
      %p179 = por %p177, %p178
      %p180 = scmp.ne.s32.totalorder %s169, %s172
      %p181 = scmp.eq.s32.totalorder %s27, 2
      %p182 = por %p180, %p181
      %p183 = scmp.ne.s32.totalorder %s172, %s173
      %p184 = scmp.eq.s32.totalorder %s27, 0
      %p185 = por %p183, %p184
      %p186 = scmp.ne.s32.totalorder %s172, %s173
      %p187 = scmp.eq.s32.totalorder %s28, 2
      %p188 = por %p186, %p187
      %p190 = scmp.ne.s32.totalorder %s173, %s189
      %p191 = scmp.eq.s32.totalorder %s28, 0
      %p192 = por %p190, %p191
      %p193 = scmp.le.s32.totalorder 1, %s22
      %p194 = scmp.lt.s32.totalorder %s22, 4
      %p195 = pnand %p193, %p194
      %p196 = pneg %p195
      // Predicated region
      $region9: #{projector_forward.3} parent=5 // pred_check
        _
      $region10: #{projector_forward.3} parent=5 // pred_check_branch
        %198 = sbr.rel (%p195) target = $region12
      $region11: #{projector_forward.3} parent=5 // pred_region
        %s199 = ssub.s32 %s22, 1
      $region12: #{projector_forward.3} parent=5 // pred_fallthru
        _
      %p200 = scmp.lt.s32.totalorder %s22, 3
      // Predicated region
      $region13: #{projector_forward.3} parent=5 // pred_check
        %p201 = pneg %p200
      $region14: #{projector_forward.3} parent=5 // pred_check_branch
        %203 = sbr.rel (%p201) target = $region16
      $region15: #{projector_forward.3} parent=5 // pred_region
        // Predicated region
        $region17: #{projector_forward.3} parent=15 // pred_check
          %p204 = pneg %p63
        $region18: #{projector_forward.3} parent=15 // pred_check_branch
          %206 = sbr.rel (%p204) target = $region20
        $region19: #{projector_forward.3} parent=15 // pred_region
          %s207 = sand.u32 %s53, 1
          %s208 = scalar_lea.sflag [#allocation4], %s207
          %s209 = sand.u32 %s53, 1
          %s210 = smul.addr %s209, 16
          %s211 = scalar_lea.vmem [#allocation3], %s210
          %s212 = smul.u32 4, %s30
          %s214 = ssub.s32 256, 256
          %215 = vsyncadd %s208, %s214
          %s216 = smul.addr %s29, 4
          %s217 = sadd.s32 %s212, %s216
          %s218 = smul.addr %s217, 64
          %s219 = scalar_lea.hbm %s0, %s218
          %s220 = sshll.u32 %s211, 4
          %s221 = int_to_ptr.vmem [resolvable:$true] %s220
          %226 = dma.hbm_to_vmem [thread:$0]  %s219, 256, %s221, %s208, 64, 64, 4
        $region20: #{projector_forward.3} parent=15 // pred_fallthru
          _
        // Predicated region
        $region21: #{projector_forward.3} parent=15 // pred_check
          %p227 = pneg %p91
        $region22: #{projector_forward.3} parent=15 // pred_check_branch
          %229 = sbr.rel (%p227) target = $region24
        $region23: #{projector_forward.3} parent=15 // pred_region
          %s230 = sand.u32 %s22, 1
          %s231 = scalar_lea.sflag [#allocation7], %s230
          %s232 = sand.u32 %s81, 1
          %s233 = smul.addr %s232, 16
          %s234 = scalar_lea.vmem [#allocation6], %s233
          %s236 = ssub.s32 256, 256
          %237 = vsyncadd %s231, %s236
          %s238 = smul.addr %s29, 4
          %s239 = sadd.s32 %s31, %s238
          %s240 = smul.addr %s239, 64
          %s241 = scalar_lea.hbm %s1, %s240
          %s242 = sshll.u32 %s234, 4
          %s243 = int_to_ptr.vmem [resolvable:$true] %s242
          %248 = dma.hbm_to_vmem [thread:$0]  %s241, 256, %s243, %s231, 64, 64, 4
        $region24: #{projector_forward.3} parent=15 // pred_fallthru
          _
        // Predicated region
        $region25: #{projector_forward.3} parent=15 // pred_check
          %p249 = pneg %p119
        $region26: #{projector_forward.3} parent=15 // pred_check_branch
          %251 = sbr.rel (%p249) target = $region28
        $region27: #{projector_forward.3} parent=15 // pred_region
          %s252 = sand.u32 %s22, 1
          %s253 = scalar_lea.sflag [#allocation7], %s252
          %s254 = sand.u32 %s109, 1
          %s255 = scalar_lea.vmem [#allocation8], %s254
          %s257 = ssub.s32 16, 16
          %258 = vsyncadd %s253, %s257
          %s259 = sadd.s32 %s31, %s29
          %s260 = smul.addr %s259, 16
          %s261 = scalar_lea.hbm %s2, %s260
          %s263 = sshll.u32 %s255, 4
          %s264 = int_to_ptr.vmem [resolvable:$true] %s263
          %266 = dma.hbm_to_vmem [thread:$0]  %s261, 16, %s264, %s253
        $region28: #{projector_forward.3} parent=15 // pred_fallthru
          _
        // Predicated region
        $region29: #{projector_forward.3} parent=15 // pred_check
          %p267 = pneg %p149
        $region30: #{projector_forward.3} parent=15 // pred_check_branch
          %269 = sbr.rel (%p267) target = $region32
        $region31: #{projector_forward.3} parent=15 // pred_region
          %s270 = sand.u32 %s139, 1
          %s271 = scalar_lea.sflag [#allocation10], %s270
          %s272 = sand.u32 %s139, 1
          %s273 = smul.addr %s272, 16
          %s274 = scalar_lea.vmem [#allocation9], %s273
          %s275 = smul.u32 4, %s30
          %s277 = ssub.s32 256, 256
          %278 = vsyncadd %s271, %s277
          %s279 = sadd.s32 %s31, %s275
          %s280 = smul.addr %s29, 4
          %s281 = sadd.s32 %s279, %s280
          %s282 = smul.addr %s281, 64
          %s283 = scalar_lea.hbm %s3, %s282
          %s284 = sshll.u32 %s274, 4
          %s285 = int_to_ptr.vmem [resolvable:$true] %s284
          %290 = dma.hbm_to_vmem [thread:$0]  %s283, 256, %s285, %s271, 64, 64, 4
        $region32: #{projector_forward.3} parent=15 // pred_fallthru
          _
      $region16: #{projector_forward.3} parent=5 // pred_fallthru
        _
      %p291 = scmp.le.s32.totalorder 1, %s22
      %p292 = scmp.lt.s32.totalorder %s22, 4
      %p293 = pnand %p291, %p292
      %p294 = pneg %p293
      // Predicated region
      $region33: #{projector_forward.3} parent=5 // pred_check
        _
      $region34: #{projector_forward.3} parent=5 // pred_check_branch
        %296 = sbr.rel (%p293) target = $region36
      $region35: #{projector_forward.3} parent=5 // pred_region
        %s297 = ssub.s32 %s22, 1
        %s298 = sand.u32 %s56, 1
        %s299 = scalar_lea.sflag [#allocation4], %s298
        %s300 = sand.u32 %s56, 1
        %s301 = smul.addr %s300, 16
        %s302 = scalar_lea.vmem [#allocation3], %s301
        // Predicated region
        $region37: #{projector_forward.3} parent=35 // pred_check
          %p303 = pneg %p69
        $region38: #{projector_forward.3} parent=35 // pred_check_branch
          %305 = sbr.rel (%p303) target = $region40
        $region39: #{projector_forward.3} parent=35 // pred_region
          %306 = dma.done %s299, 256
        $region40: #{projector_forward.3} parent=35 // pred_fallthru
          _
        %s307 = sand.u32 %s27, 1
        %s308 = scalar_lea.sflag [#allocation7], %s307
        %s309 = sand.u32 %s84, 1
        %s310 = smul.addr %s309, 16
        %s311 = scalar_lea.vmem [#allocation6], %s310
        // Predicated region
        $region41: #{projector_forward.3} parent=35 // pred_check
          %p312 = pneg %p97
        $region42: #{projector_forward.3} parent=35 // pred_check_branch
          %314 = sbr.rel (%p312) target = $region44
        $region43: #{projector_forward.3} parent=35 // pred_region
          %315 = dma.done %s308, 256
        $region44: #{projector_forward.3} parent=35 // pred_fallthru
          _
        %s316 = sand.u32 %s27, 1
        %s317 = scalar_lea.sflag [#allocation7], %s316
        %s318 = sand.u32 %s112, 1
        %s319 = scalar_lea.vmem [#allocation8], %s318
        // Predicated region
        $region45: #{projector_forward.3} parent=35 // pred_check
          %p320 = pneg %p125
        $region46: #{projector_forward.3} parent=35 // pred_check_branch
          %322 = sbr.rel (%p320) target = $region48
        $region47: #{projector_forward.3} parent=35 // pred_region
          %323 = dma.done %s317, 16
        $region48: #{projector_forward.3} parent=35 // pred_fallthru
          _
        %s324 = sand.u32 %s142, 1
        %s325 = scalar_lea.sflag [#allocation10], %s324
        %s326 = sand.u32 %s142, 1
        %s327 = smul.addr %s326, 16
        %s328 = scalar_lea.vmem [#allocation9], %s327
        // Predicated region
        $region49: #{projector_forward.3} parent=35 // pred_check
          %p329 = pneg %p155
        $region50: #{projector_forward.3} parent=35 // pred_check_branch
          %331 = sbr.rel (%p329) target = $region52
        $region51: #{projector_forward.3} parent=35 // pred_region
          %332 = dma.done %s325, 256
        $region52: #{projector_forward.3} parent=35 // pred_fallthru
          _
        %s333 = sand.u32 %s56, 1
        %s334 = scalar_lea.sflag [#allocation4], %s333
        %s335 = sand.u32 %s56, 1
        %s336 = smul.addr %s335, 16
        %s337 = scalar_lea.vmem [#allocation3], %s336
        %p338 = pneg %p69
        %p339 = pneg %p66
        %s340 = sand.u32 %s27, 1
        %s341 = scalar_lea.sflag [#allocation7], %s340
        %s342 = sand.u32 %s84, 1
        %s343 = smul.addr %s342, 16
        %s344 = scalar_lea.vmem [#allocation6], %s343
        %p345 = pneg %p97
        %p346 = pneg %p94
        %s347 = sand.u32 %s27, 1
        %s348 = scalar_lea.sflag [#allocation7], %s347
        %s349 = sand.u32 %s112, 1
        %s350 = scalar_lea.vmem [#allocation8], %s349
        %p351 = pneg %p125
        %p352 = pneg %p122
        %s353 = sand.u32 %s142, 1
        %s354 = scalar_lea.sflag [#allocation10], %s353
        %s355 = sand.u32 %s142, 1
        %s356 = smul.addr %s355, 16
        %s357 = scalar_lea.vmem [#allocation9], %s356
        %p358 = pneg %p155
        %p359 = pneg %p152
        %p360 = pneg %p185
        %p361 = pneg %p182
        %s362 = sand.u32 %s172, 1
        %s363 = scalar_lea.sflag [#allocation5], %s362
        %s364 = sand.u32 %s172, 1
        %s365 = smul.addr %s364, 16
        %s366 = scalar_lea.vmem [#allocation11], %s365
        %s367 = smul.u32 4, %s33
        %s368 = smul.u32 4, %s33
        %s369 = smul.u32 4, %s33
        %p371 = scmp.eq.s32.totalorder %s34, 0
        // Predicated region
        $region53: #{projector_forward.3} parent=35 // pred_check
          %p372 = pneg %p371
        $region54: #{projector_forward.3} parent=35 // pred_check_branch
          %374 = sbr.rel (%p372) target = $region56
        $region55: #{projector_forward.3} parent=35 // pred_region
          %v375 = vld [vmem:[%s302] sm:$0xf]
          %v376 = vld [vmem:[%s302 + $0x4] sm:$0xf]
          %v377 = vld [vmem:[%s302 + $0x8] sm:$0xf]
          %v378 = vld [vmem:[%s302 + $0xc] sm:$0xf]
          %v379 = vunpack.c.l.bf16 %v375
          %v380 = vunpack.c.l.bf16 %v376
          %v381 = vunpack.c.l.bf16 %v377
          %v382 = vunpack.c.l.bf16 %v378
          %vm383 = vcmask 261120
          %v384 = vsel %vm383, %v379, 0.0
          %385 = vadd.xlane.f32.xlu0 %v384
          %v386 = vpop.xlane.xlu0 %385
          %v387 = vsel %vm383, %v380, 0.0
          %388 = vadd.xlane.f32.xlu0 %v387
          %v389 = vpop.xlane.xlu0 %388
          %v390 = vsel %vm383, %v381, 0.0
          %391 = vadd.xlane.f32.xlu0 %v390
          %v392 = vpop.xlane.xlu0 %391
          %v393 = vsel %vm383, %v382, 0.0
          %394 = vadd.xlane.f32.xlu0 %v393
          %v395 = vpop.xlane.xlu0 %394
          %v396 = vrcp.pop 32.0
          %v397 = vmul.f32 %v386, %v396
          %v398 = vmul.f32 %v389, %v396
          %v399 = vmul.f32 %v392, %v396
          %v400 = vmul.f32 %v395, %v396
          %v401 = vsub.f32 %v379, %v397
          %v402 = vsub.f32 %v380, %v398
          %v403 = vsub.f32 %v381, %v399
          %v404 = vsub.f32 %v382, %v400
          %v405 = vmul.f32 %v401, %v401
          %v406 = vmul.f32 %v402, %v402
          %v407 = vmul.f32 %v403, %v403
          %v408 = vmul.f32 %v404, %v404
          %v409 = vsel %vm383, %v405, 0.0
          %410 = vadd.xlane.f32.xlu0 %v409
          %v411 = vpop.xlane.xlu0 %410
          %v412 = vsel %vm383, %v406, 0.0
          %413 = vadd.xlane.f32.xlu0 %v412
          %v414 = vpop.xlane.xlu0 %413
          %v415 = vsel %vm383, %v407, 0.0
          %416 = vadd.xlane.f32.xlu0 %v415
          %v417 = vpop.xlane.xlu0 %416
          %v418 = vsel %vm383, %v408, 0.0
          %419 = vadd.xlane.f32.xlu0 %v418
          %v420 = vpop.xlane.xlu0 %419
          %v421 = vmul.f32 %v411, %v396
          %v422 = vmul.f32 %v414, %v396
          %v423 = vmul.f32 %v417, %v396
          %v424 = vmul.f32 %v420, %v396
          %v425 = vadd.f32 %v421, 1e-05
          %v426 = vadd.f32 %v422, 1e-05
          %v427 = vadd.f32 %v423, 1e-05
          %v428 = vadd.f32 %v424, 1e-05
          %v429 = vrsqrt.pop %v425
          %v430 = vrsqrt.pop %v426
          %v431 = vrsqrt.pop %v427
          %v432 = vrsqrt.pop %v428
          %v433 = vmul.f32 %v401, %v429
          %v434 = vmul.f32 %v402, %v430
          %v435 = vmul.f32 %v403, %v431
          %v436 = vmul.f32 %v404, %v432
          %v437 = vpack.c.bf16 %v434, %v433
          %v438 = vpack.c.bf16 %v436, %v435
          %439 = vst.msk [vmem:[#allocation2] sm:$0xff] %vm383, %v437
          %440 = vst.msk [vmem:[#allocation2 + $0x8] sm:$0xff] %vm383, %v438
        $region56: #{projector_forward.3} parent=35 // pred_fallthru
          _
        %v441 = vld [vmem:[#allocation2] sm:$0xff]
        %v442 = vld [vmem:[#allocation2 + $0x8] sm:$0xff]
        %v443 = vld [vmem:[%s311] sm:$0xf]
        %v444 = vld [vmem:[%s311 + $0x4] sm:$0xf]
        %v445 = vld [vmem:[%s311 + $0x8] sm:$0xf]
        %v446 = vld [vmem:[%s311 + $0xc] sm:$0xf]
        %v447 = vld [vmem:[%s319] sm:$0x1]
        %v449 = vlaneseq
        %v450 = vshrl.u32 %v449, 7
        %v451 = vsub.s32 0, %v450
        %v452 = vrot.slane %v447, %v451
        %v458 = vunpack.c.l.b16 %v443
        %v459 = vunpack.c.l.b16 %v444
        %v460 = vunpack.c.l.b16 %v445
        %v461 = vunpack.c.l.b16 %v446
        %v462 = vpack.c.b16 %v459, %v458
        %v463 = vpack.c.b16 %v461, %v460
        %vm466 = vcmask 261120
        %v468 = vsel %vm466, %v441, 0
        %v471 = vsel %vm466, %v442, 0
        %473 = vmatprep.subr.bf16.mxu0 0
        %474 = vmatpush1.bf16.msra.mxu0 %v462
        %475 = vmatprep.subr.bf16.mxu0 0
        %476 = vmatpush1.bf16.msra.mxu0 %v463
        %477 = vmatprep.subr.bf16.mxu0 0
        %478 = vmatpush1.bf16.msra.mxu0 0
        %479 = vmatprep.subr.bf16.mxu0 0
        %480 = vmatpush1.bf16.msra.mxu0 0
        %481 = vmatprep.subr.bf16.mxu0 0
        %482 = vmatpush1.bf16.msra.mxu0 0
        %483 = vmatprep.subr.bf16.mxu0 0
        %484 = vmatpush1.bf16.msra.mxu0 0
        %485 = vmatprep.subr.bf16.mxu0 0
        %486 = vmatpush1.bf16.msra.mxu0 0
        %487 = vmatprep.subr.bf16.mxu0 0
        %488 = vmatpush1.bf16.msra.mxu0 0
        %489 = vmatprep.subr.bf16.mxu0 0
        %490 = vmatpush1.bf16.msra.mxu0 0
        %491 = vmatprep.subr.bf16.mxu0 0
        %492 = vmatpush1.bf16.msra.mxu0 0
        %493 = vmatprep.subr.bf16.mxu0 0
        %494 = vmatpush1.bf16.msra.mxu0 0
        %495 = vmatprep.subr.bf16.mxu0 0
        %496 = vmatpush1.bf16.msra.mxu0 0
        %497 = vmatprep.subr.bf16.mxu0 0
        %498 = vmatpush1.bf16.msra.mxu0 0
        %499 = vmatprep.subr.bf16.mxu0 0
        %500 = vmatpush1.bf16.msra.mxu0 0
        %501 = vmatprep.subr.bf16.mxu0 0
        %502 = vmatpush1.bf16.msra.mxu0 0
        %503 = vmatprep.subr.bf16.mxu0 0
        %504 = vmatpush1.bf16.msra.mxu0 0
        %505 = vmatprep.mubr.bf16.mxu0 0
        %506 = vmatmul.mubr.bf16.gmra.mrb[0].mxu0 %v468
        %v507 = vpop.f32.mrb[0].mxu0
        %v508 = vadd.f32 %v452, %v507
        %v509 = vpop.f32.mrb[0].mxu0
        %v510 = vpop.f32.mrb[0].mxu0
        %v511 = vadd.f32 %v452, %v510
        %v512 = vpop.f32.mrb[0].mxu0
        %513 = vmatprep.mubr.bf16.mxu0 0
        %514 = vmatmul.mubr.bf16.gmra.mrb[0].mxu0 %v471
        %v515 = vpop.f32.mrb[0].mxu0
        %v516 = vadd.f32 %v452, %v515
        %v517 = vpop.f32.mrb[0].mxu0
        %v518 = vpop.f32.mrb[0].mxu0
        %v519 = vadd.f32 %v452, %v518
        %v520 = vpop.f32.mrb[0].mxu0
        %521 = vdwg.mxu0
        %v522 = vld [vmem:[%s328] sm:$0xf]
        %v523 = vld [vmem:[%s328 + $0x4] sm:$0xf]
        %v524 = vld [vmem:[%s328 + $0x8] sm:$0xf]
        %v525 = vld [vmem:[%s328 + $0xc] sm:$0xf]
        %v526 = vunpack.c.l.bf16 %v522
        %v527 = vunpack.c.l.bf16 %v523
        %v528 = vunpack.c.l.bf16 %v524
        %v529 = vunpack.c.l.bf16 %v525
        %v530 = vadd.f32 %v508, %v526
        %v531 = vadd.f32 %v511, %v527
        %v532 = vadd.f32 %v516, %v528
        %v533 = vadd.f32 %v519, %v529
        %v534 = vpack.c.bf16 %v531, %v530
        %v535 = vpack.c.bf16 %v533, %v532
        %v538 = vunpack.c.l.b16 %v534
        %v539 = vunpack.c.h.b16 %v534
        %v540 = vunpack.c.l.b16 %v535
        %v541 = vunpack.c.h.b16 %v535
        %v542 = vpack.c.b16 %v538, %v538
        %v543 = vpack.c.b16 %v539, %v539
        %v544 = vpack.c.b16 %v540, %v540
        %v545 = vpack.c.b16 %v541, %v541
        %550 = vst [vmem:[%s366] sm:$0xf] %v542
        %551 = vst [vmem:[%s366 + $0x4] sm:$0xf] %v543
        %552 = vst [vmem:[%s366 + $0x8] sm:$0xf] %v544
        %553 = vst [vmem:[%s366 + $0xc] sm:$0xf] %v545
        %s554 = sand.u32 %s172, 1
        %s555 = scalar_lea.sflag [#allocation5], %s554
        %s556 = sand.u32 %s172, 1
        %s557 = smul.addr %s556, 16
        %s558 = scalar_lea.vmem [#allocation11], %s557
        // Predicated region
        $region57: #{projector_forward.3} parent=35 // pred_check
          %p559 = pneg %p182
        $region58: #{projector_forward.3} parent=35 // pred_check_branch
          %561 = sbr.rel (%p559) target = $region60
        $region59: #{projector_forward.3} parent=35 // pred_region
          %s562 = smul.u32 4, %s33
          %s564 = ssub.s32 256, 256
          %565 = vsyncadd %s555, %s564
          %s566 = sadd.s32 %s34, %s562
          %s567 = smul.addr %s32, 4
          %s568 = sadd.s32 %s566, %s567
          %s569 = smul.addr %s568, 64
          %s570 = scalar_lea.hbm %s4, %s569
          %s571 = sshll.u32 %s558, 4
          %s572 = int_to_ptr.vmem [resolvable:$true] %s571
          %577 = dma.vmem_to_hbm [thread:$0]  %s572, 256, %s570, %s555, 64, 64, 4
        $region60: #{projector_forward.3} parent=35 // pred_fallthru
          _
      $region36: #{projector_forward.3} parent=5 // pred_fallthru
        _
      %p578 = scmp.le.s32.totalorder 2, %s22
      // Predicated region
      $region61: #{projector_forward.3} parent=5 // pred_check
        %p579 = pneg %p578
      $region62: #{projector_forward.3} parent=5 // pred_check_branch
        %581 = sbr.rel (%p579) target = $region64
      $region63: #{projector_forward.3} parent=5 // pred_region
        %s582 = ssub.s32 %s22, 2
        // Predicated region
        $region65: #{projector_forward.3} parent=63 // pred_check
          %p583 = pneg %p188
        $region66: #{projector_forward.3} parent=63 // pred_check_branch
          %585 = sbr.rel (%p583) target = $region68
        $region67: #{projector_forward.3} parent=63 // pred_region
          %s586 = sand.u32 %s173, 1
          %s587 = scalar_lea.sflag [#allocation5], %s586
          %s588 = sand.u32 %s173, 1
          %s589 = smul.addr %s588, 16
          %s590 = scalar_lea.vmem [#allocation11], %s589
          %591 = dma.done %s587, 256
        $region68: #{projector_forward.3} parent=63 // pred_fallthru
          _
      $region64: #{projector_forward.3} parent=5 // pred_fallthru
        _
    $region6: #{projector_forward.3} parent=1 // loop_footer
      %s26 = sadd.s32 1, %s22
    $region7: #{projector_forward.3} parent=1 // loop_footer_branch
      %21 = sbr.rel target = $region3
    $region8: #{projector_forward.3} parent=1 // loop_exit
      _
    %592 = vsyncpa [#allocation4], 1
    %s593 = scalar_lea.sflag [#allocation4], 1
    %594 = vsyncpa %s593, 1
    %595 = vsyncpa [#allocation7], 1
    %s596 = scalar_lea.sflag [#allocation7], 1
    %597 = vsyncpa %s596, 1
    %598 = vsyncpa [#allocation10], 1
    %s599 = scalar_lea.sflag [#allocation10], 1
    %600 = vsyncpa %s599, 1
    %601 = vsyncpa [#allocation5], 1
    %s602 = scalar_lea.sflag [#allocation5], 1
    %603 = vsyncpa %s602, 1

// kernel: projector_forward.2
$region0: #{projector_forward.2}
  #allocation0 [shape = 'u32[]', space=smem, size = 0x4, offset = 0x4, fixed_abs, tag = 'smem constant byte address 0x4 - core index']
  #allocation1 [shape = 'u32[144,128]{1,0:T(1,128)}', space=vmem, size = 0x12000, scoped, tag = 'internal scratch']
  #allocation2 [shape = 'bf16[16,32]{1,0:T(16,128)(2,1)}', space=vmem, size = 0x1000, scoped, tag = 'scratch operand']
  #allocation3 [shape = 'f32[16,1]{1,0:T(8,128)}', space=vmem, size = 0x2000, scoped, tag = 'scratch operand']
  %s0 = inlined_call_operand.hbm [shape: bf16[2,16,32], index: 0, kind: input, shape index: {}]
  %s1 = inlined_call_operand.hbm [shape: bf16[1,32,128], index: 1, kind: input, shape index: {}]
  %s2 = inlined_call_operand.hbm [shape: f32[1,1,128], index: 2, kind: input, shape index: {}]
  %s3 = inlined_call_operand.hbm [shape: bf16[2,1,128], index: 3, kind: input, shape index: {}]
  %s4 = inlined_call_operand.hbm [shape: bf16[2,16,128], index: 4, kind: output, shape index: {}]
  %s5 = sld [smem:[#allocation0]]
  $region69: #{projector_forward.2} parent=0
    _
  %s7 = ssub.s32 1, %s5
  %s8 = scalar_select 0, %s7, %s5
  $region1: #{projector_forward.2} parent=0
    #allocation4 [shape = 'u8[8192]{0}', space=vmem, size = 0x2000, scoped, tag = 'input window, operand 0']
    #allocation5 [shape = 's32[2]{0}', space=sflag, size = 0x8, scoped, tag = 'scoped memory for projector_forward.2']
    #allocation6 [shape = 's32[2]{0}', space=sflag, size = 0x8, scoped, tag = 'scoped memory for projector_forward.2']
    #allocation7 [shape = 'u8[8192]{0}', space=vmem, size = 0x2000, scoped, tag = 'input window, operand 1, single buffered']
    #allocation8 [shape = 's32[1]{0}', space=sflag, size = 0x4, scoped, tag = 'scoped memory for projector_forward.2']
    #allocation9 [shape = 'u8[512]{0}', space=vmem, size = 0x400, scoped, tag = 'input window, operand 2, single buffered']
    #allocation10 [shape = 'u8[1024]{0}', space=vmem, size = 0x400, scoped, tag = 'input window, operand 3']
    #allocation11 [shape = 's32[2]{0}', space=sflag, size = 0x8, scoped, tag = 'scoped memory for projector_forward.2']
    #allocation12 [shape = 'u8[8192]{0}', space=vmem, size = 0x2000, scoped, tag = 'output window, operand 0']
    %9 = vsyncpa [#allocation5], 0
    %s10 = scalar_lea.sflag [#allocation5], 1
    %11 = vsyncpa %s10, 0
    %12 = vsyncpa [#allocation8], 0
    %13 = vsyncpa [#allocation11], 0
    %s14 = scalar_lea.sflag [#allocation11], 1
    %15 = vsyncpa %s14, 0
    %16 = vsyncpa [#allocation6], 0
    %s17 = scalar_lea.sflag [#allocation6], 1
    %18 = vsyncpa %s17, 0
    loop: start=0, step=1, limit=4
    $region2: #{projector_forward.2} parent=1 // loop_pre_header
      _
    $region3: #{projector_forward.2} parent=1 // loop_header
      %s20 = sphi 0, %s24
      %p21 = scmp.ge.s32.totalorder %s20, 4
      %s27 = sphi 0, %s46
      %s28 = sphi 0, %s42
      %s29 = sphi 0, %s38
      %s30 = sphi 0, %s27
      %s31 = sphi 0, %s28
      %s32 = sphi 0, %s29
      %s33 = sphi 0, %s30
      %s34 = sphi 0, %s31
      %s35 = sphi 0, %s32
      %s51 = sphi 0, %s53
      %s54 = sphi 0, %s51
      %s55 = sphi 0, %s54
      %s71 = sphi 0, %s55
      %s77 = sphi 0, %s79
      %s80 = sphi 0, %s77
      %s81 = sphi 0, %s80
      %s97 = sphi 0, %s81
      %s103 = sphi 0, %s105
      %s106 = sphi 0, %s103
      %s107 = sphi 0, %s106
      %s123 = sphi 0, %s107
      %s131 = sphi 0, %s133
      %s134 = sphi 0, %s131
      %s135 = sphi 0, %s134
      %s151 = sphi 0, %s135
      %s161 = sphi 0, %s163
      %s164 = sphi 0, %s161
      %s165 = sphi 0, %s164
      %s181 = sphi 0, %s165
    $region4: #{projector_forward.2} parent=1 // loop_header_branch
      %23 = sbr.rel (%p21) target = $region8
    $region5: #{projector_forward.2} parent=1 // loop_body
      %s25 = ssub.s32 %s20, 1
      %s26 = ssub.s32 %s20, 2
      %s36 = sadd.s32 1, %s29
      %p37 = scmp.ge.s32.totalorder %s36, 1
      %s38 = scalar_select %p37, 0, %s36
      %s39 = sadd.s32 1, %s28
      %s40 = scalar_select %p37, %s39, %s28
      %p41 = scmp.ge.s32.totalorder %s40, 1
      %s42 = scalar_select %p41, 0, %s40
      %s43 = sadd.s32 1, %s27
      %s44 = scalar_select %p41, %s43, %s27
      %p45 = scmp.ge.s32.totalorder %s44, 2
      %s46 = scalar_select %p45, 0, %s44
      %s47 = ssub.s32 %s27, %s46
      %s48 = ssub.s32 %s28, %s42
      %s49 = sor.u32 %s47, %s48
      %p50 = scmp.eq.s32.totalorder %s49, 0
      %s52 = sadd.s32 %s51, 1
      %s53 = scalar_select %p50, %s51, %s52
      %p56 = pneg %p50
      %p57 = scmp.eq.s32.totalorder %s20, 1
      %p58 = por %p56, %p57
      %p59 = scmp.ne.s32.totalorder %s51, %s54
      %p60 = scmp.eq.s32.totalorder %s20, 0
      %p61 = por %p59, %p60
      %p62 = scmp.ne.s32.totalorder %s51, %s54
      %p63 = scmp.eq.s32.totalorder %s25, 1
      %p64 = por %p62, %p63
      %p65 = scmp.ne.s32.totalorder %s54, %s55
      %p66 = scmp.eq.s32.totalorder %s25, 0
      %p67 = por %p65, %p66
      %p68 = scmp.ne.s32.totalorder %s54, %s55
      %p69 = scmp.eq.s32.totalorder %s26, 1
      %p70 = por %p68, %p69
      %p72 = scmp.ne.s32.totalorder %s55, %s71
      %p73 = scmp.eq.s32.totalorder %s26, 0
      %p74 = por %p72, %p73
      %s75 = ssub.s32 %s29, %s38
      %p76 = scmp.eq.s32.totalorder %s75, 0
      %s78 = sadd.s32 %s77, 1
      %s79 = scalar_select %p76, %s77, %s78
      %p82 = pneg %p76
      %p83 = scmp.eq.s32.totalorder %s20, 1
      %p84 = por %p82, %p83
      %p85 = scmp.ne.s32.totalorder %s77, %s80
      %p86 = scmp.eq.s32.totalorder %s20, 0
      %p87 = por %p85, %p86
      %p88 = scmp.ne.s32.totalorder %s77, %s80
      %p89 = scmp.eq.s32.totalorder %s25, 1
      %p90 = por %p88, %p89
      %p91 = scmp.ne.s32.totalorder %s80, %s81
      %p92 = scmp.eq.s32.totalorder %s25, 0
      %p93 = por %p91, %p92
      %p94 = scmp.ne.s32.totalorder %s80, %s81
      %p95 = scmp.eq.s32.totalorder %s26, 1
      %p96 = por %p94, %p95
      %p98 = scmp.ne.s32.totalorder %s81, %s97
      %p99 = scmp.eq.s32.totalorder %s26, 0
      %p100 = por %p98, %p99
      %s101 = ssub.s32 %s29, %s38
      %p102 = scmp.eq.s32.totalorder %s101, 0
      %s104 = sadd.s32 %s103, 1
      %s105 = scalar_select %p102, %s103, %s104
      %p108 = pneg %p102
      %p109 = scmp.eq.s32.totalorder %s20, 1
      %p110 = por %p108, %p109
      %p111 = scmp.ne.s32.totalorder %s103, %s106
      %p112 = scmp.eq.s32.totalorder %s20, 0
      %p113 = por %p111, %p112
      %p114 = scmp.ne.s32.totalorder %s103, %s106
      %p115 = scmp.eq.s32.totalorder %s25, 1
      %p116 = por %p114, %p115
      %p117 = scmp.ne.s32.totalorder %s106, %s107
      %p118 = scmp.eq.s32.totalorder %s25, 0
      %p119 = por %p117, %p118
      %p120 = scmp.ne.s32.totalorder %s106, %s107
      %p121 = scmp.eq.s32.totalorder %s26, 1
      %p122 = por %p120, %p121
      %p124 = scmp.ne.s32.totalorder %s107, %s123
      %p125 = scmp.eq.s32.totalorder %s26, 0
      %p126 = por %p124, %p125
      %s127 = ssub.s32 %s27, %s46
      %s128 = ssub.s32 %s29, %s38
      %s129 = sor.u32 %s127, %s128
      %p130 = scmp.eq.s32.totalorder %s129, 0
      %s132 = sadd.s32 %s131, 1
      %s133 = scalar_select %p130, %s131, %s132
      %p136 = pneg %p130
      %p137 = scmp.eq.s32.totalorder %s20, 1
      %p138 = por %p136, %p137
      %p139 = scmp.ne.s32.totalorder %s131, %s134
      %p140 = scmp.eq.s32.totalorder %s20, 0
      %p141 = por %p139, %p140
      %p142 = scmp.ne.s32.totalorder %s131, %s134
      %p143 = scmp.eq.s32.totalorder %s25, 1
      %p144 = por %p142, %p143
      %p145 = scmp.ne.s32.totalorder %s134, %s135
      %p146 = scmp.eq.s32.totalorder %s25, 0
      %p147 = por %p145, %p146
      %p148 = scmp.ne.s32.totalorder %s134, %s135
      %p149 = scmp.eq.s32.totalorder %s26, 1
      %p150 = por %p148, %p149
      %p152 = scmp.ne.s32.totalorder %s135, %s151
      %p153 = scmp.eq.s32.totalorder %s26, 0
      %p154 = por %p152, %p153
      %s155 = ssub.s32 %s27, %s46
      %s156 = ssub.s32 %s28, %s42
      %s157 = sor.u32 %s155, %s156
      %s158 = ssub.s32 %s29, %s38
      %s159 = sor.u32 %s157, %s158
      %p160 = scmp.eq.s32.totalorder %s159, 0
      %s162 = sadd.s32 %s161, 1
      %s163 = scalar_select %p160, %s161, %s162
      %p166 = pneg %p160
      %p167 = scmp.eq.s32.totalorder %s20, 1
      %p168 = por %p166, %p167
      %p169 = scmp.ne.s32.totalorder %s161, %s164
      %p170 = scmp.eq.s32.totalorder %s20, 0
      %p171 = por %p169, %p170
      %p172 = scmp.ne.s32.totalorder %s161, %s164
      %p173 = scmp.eq.s32.totalorder %s25, 1
      %p174 = por %p172, %p173
      %p175 = scmp.ne.s32.totalorder %s164, %s165
      %p176 = scmp.eq.s32.totalorder %s25, 0
      %p177 = por %p175, %p176
      %p178 = scmp.ne.s32.totalorder %s164, %s165
      %p179 = scmp.eq.s32.totalorder %s26, 1
      %p180 = por %p178, %p179
      %p182 = scmp.ne.s32.totalorder %s165, %s181
      %p183 = scmp.eq.s32.totalorder %s26, 0
      %p184 = por %p182, %p183
      %p185 = scmp.le.s32.totalorder 1, %s20
      %p186 = scmp.lt.s32.totalorder %s20, 3
      %p187 = pnand %p185, %p186
      %p188 = pneg %p187
      // Predicated region
      $region9: #{projector_forward.2} parent=5 // pred_check
        _
      $region10: #{projector_forward.2} parent=5 // pred_check_branch
        %190 = sbr.rel (%p187) target = $region12
      $region11: #{projector_forward.2} parent=5 // pred_region
        %s191 = ssub.s32 %s20, 1
        // Predicated region
        $region13: #{projector_forward.2} parent=11 // pred_check
          %p192 = pneg %p93
        $region14: #{projector_forward.2} parent=11 // pred_check_branch
          %194 = sbr.rel (%p192) target = $region16
        $region15: #{projector_forward.2} parent=11 // pred_region
          %s196 = ssub.s32 256, 256
          %197 = vsyncadd [#allocation8], %s196
          %s198 = smul.addr %s32, 64
          %s199 = scalar_lea.hbm %s1, %s198
          %s200 = sshll.u32 [#allocation7], 4
          %s201 = int_to_ptr.vmem [resolvable:$true] %s200
          %206 = dma.hbm_to_vmem [thread:$0]  %s199, 256, %s201, [#allocation8], 64, 64, 4
        $region16: #{projector_forward.2} parent=11 // pred_fallthru
          _
        // Predicated region
        $region17: #{projector_forward.2} parent=11 // pred_check
          %p207 = pneg %p119
        $region18: #{projector_forward.2} parent=11 // pred_check_branch
          %209 = sbr.rel (%p207) target = $region20
        $region19: #{projector_forward.2} parent=11 // pred_region
          %s211 = ssub.s32 16, 16
          %212 = vsyncadd [#allocation8], %s211
          %s213 = smul.addr %s32, 16
          %s214 = scalar_lea.hbm %s2, %s213
          %s216 = sshll.u32 [#allocation9], 4
          %s217 = int_to_ptr.vmem [resolvable:$true] %s216
          %219 = dma.hbm_to_vmem [thread:$0]  %s214, 16, %s217, [#allocation8]
        $region20: #{projector_forward.2} parent=11 // pred_fallthru
          _
      $region12: #{projector_forward.2} parent=5 // pred_fallthru
        _
      %p220 = scmp.lt.s32.totalorder %s20, 2
      // Predicated region
      $region21: #{projector_forward.2} parent=5 // pred_check
        %p221 = pneg %p220
      $region22: #{projector_forward.2} parent=5 // pred_check_branch
        %223 = sbr.rel (%p221) target = $region24
      $region23: #{projector_forward.2} parent=5 // pred_region
        // Predicated region
        $region25: #{projector_forward.2} parent=23 // pred_check
          %p224 = pneg %p61
        $region26: #{projector_forward.2} parent=23 // pred_check_branch
          %226 = sbr.rel (%p224) target = $region28
        $region27: #{projector_forward.2} parent=23 // pred_region
          %s227 = sand.u32 %s51, 1
          %s228 = scalar_lea.sflag [#allocation5], %s227
          %s229 = sand.u32 %s51, 1
          %s230 = smul.addr %s229, 8
          %s231 = scalar_lea.vmem [#allocation4], %s230
          %s232 = smul.u32 2, %s28
          %s234 = ssub.s32 128, 128
          %235 = vsyncadd %s228, %s234
          %s236 = smul.addr %s27, 2
          %s237 = sadd.s32 %s232, %s236
          %s238 = smul.addr %s237, 64
          %s239 = scalar_lea.hbm %s0, %s238
          %s240 = sshll.u32 %s231, 4
          %s241 = int_to_ptr.vmem [resolvable:$true] %s240
          %246 = dma.hbm_to_vmem [thread:$0]  %s239, 128, %s241, %s228, 64, 64, 4
        $region28: #{projector_forward.2} parent=23 // pred_fallthru
          _
        // Predicated region
        $region29: #{projector_forward.2} parent=23 // pred_check
          %p247 = pneg %p141
        $region30: #{projector_forward.2} parent=23 // pred_check_branch
          %249 = sbr.rel (%p247) target = $region32
        $region31: #{projector_forward.2} parent=23 // pred_region
          %s250 = sand.u32 %s131, 1
          %s251 = scalar_lea.sflag [#allocation11], %s250
          %s252 = sand.u32 %s131, 1
          %s253 = scalar_lea.vmem [#allocation10], %s252
          %s255 = ssub.s32 16, 16
          %256 = vsyncadd %s251, %s255
          %s257 = sadd.s32 %s29, %s27
          %s258 = smul.addr %s257, 16
          %s259 = scalar_lea.hbm %s3, %s258
          %s261 = sshll.u32 %s253, 4
          %s262 = int_to_ptr.vmem [resolvable:$true] %s261
          %264 = dma.hbm_to_vmem [thread:$0]  %s259, 16, %s262, %s251
        $region32: #{projector_forward.2} parent=23 // pred_fallthru
          _
      $region24: #{projector_forward.2} parent=5 // pred_fallthru
        _
      %p265 = scmp.le.s32.totalorder 1, %s20
      %p266 = scmp.lt.s32.totalorder %s20, 3
      %p267 = pnand %p265, %p266
      %p268 = pneg %p267
      // Predicated region
      $region33: #{projector_forward.2} parent=5 // pred_check
        _
      $region34: #{projector_forward.2} parent=5 // pred_check_branch
        %270 = sbr.rel (%p267) target = $region36
      $region35: #{projector_forward.2} parent=5 // pred_region
        %s271 = ssub.s32 %s20, 1
        %s272 = sand.u32 %s54, 1
        %s273 = scalar_lea.sflag [#allocation5], %s272
        %s274 = sand.u32 %s54, 1
        %s275 = smul.addr %s274, 8
        %s276 = scalar_lea.vmem [#allocation4], %s275
        // Predicated region
        $region37: #{projector_forward.2} parent=35 // pred_check
          %p277 = pneg %p67
        $region38: #{projector_forward.2} parent=35 // pred_check_branch
          %279 = sbr.rel (%p277) target = $region40
        $region39: #{projector_forward.2} parent=35 // pred_region
          %280 = dma.done %s273, 128
        $region40: #{projector_forward.2} parent=35 // pred_fallthru
          _
        // Predicated region
        $region41: #{projector_forward.2} parent=35 // pred_check
          %p281 = pneg %p93
        $region42: #{projector_forward.2} parent=35 // pred_check_branch
          %283 = sbr.rel (%p281) target = $region44
        $region43: #{projector_forward.2} parent=35 // pred_region
          %284 = dma.done [#allocation8], 256
        $region44: #{projector_forward.2} parent=35 // pred_fallthru
          _
        // Predicated region
        $region45: #{projector_forward.2} parent=35 // pred_check
          %p285 = pneg %p119
        $region46: #{projector_forward.2} parent=35 // pred_check_branch
          %287 = sbr.rel (%p285) target = $region48
        $region47: #{projector_forward.2} parent=35 // pred_region
          %288 = dma.done [#allocation8], 16
        $region48: #{projector_forward.2} parent=35 // pred_fallthru
          _
        %s289 = sand.u32 %s134, 1
        %s290 = scalar_lea.sflag [#allocation11], %s289
        %s291 = sand.u32 %s134, 1
        %s292 = scalar_lea.vmem [#allocation10], %s291
        // Predicated region
        $region49: #{projector_forward.2} parent=35 // pred_check
          %p293 = pneg %p147
        $region50: #{projector_forward.2} parent=35 // pred_check_branch
          %295 = sbr.rel (%p293) target = $region52
        $region51: #{projector_forward.2} parent=35 // pred_region
          %296 = dma.done %s290, 16
        $region52: #{projector_forward.2} parent=35 // pred_fallthru
          _
        %s297 = sand.u32 %s54, 1
        %s298 = scalar_lea.sflag [#allocation5], %s297
        %s299 = sand.u32 %s54, 1
        %s300 = smul.addr %s299, 8
        %s301 = scalar_lea.vmem [#allocation4], %s300
        %p302 = pneg %p67
        %p303 = pneg %p64
        %p304 = pneg %p93
        %p305 = pneg %p90
        %p306 = pneg %p119
        %p307 = pneg %p116
        %s308 = sand.u32 %s134, 1
        %s309 = scalar_lea.sflag [#allocation11], %s308
        %s310 = sand.u32 %s134, 1
        %s311 = scalar_lea.vmem [#allocation10], %s310
        %p312 = pneg %p147
        %p313 = pneg %p144
        %p314 = pneg %p177
        %p315 = pneg %p174
        %s316 = sand.u32 %s164, 1
        %s317 = scalar_lea.sflag [#allocation6], %s316
        %s318 = sand.u32 %s164, 1
        %s319 = smul.addr %s318, 8
        %s320 = scalar_lea.vmem [#allocation12], %s319
        %s321 = smul.u32 2, %s31
        %s322 = smul.u32 2, %s31
        %p324 = scmp.eq.s32.totalorder %s32, 0
        // Predicated region
        $region53: #{projector_forward.2} parent=35 // pred_check
          %p325 = pneg %p324
        $region54: #{projector_forward.2} parent=35 // pred_check_branch
          %327 = sbr.rel (%p325) target = $region56
        $region55: #{projector_forward.2} parent=35 // pred_region
          %v328 = vld [vmem:[%s276] sm:$0xf]
          %v329 = vld [vmem:[%s276 + $0x4] sm:$0xf]
          %v330 = vunpack.c.l.bf16 %v328
          %v331 = vunpack.c.l.bf16 %v329
          %vm332 = vcmask 261120
          %v333 = vsel %vm332, %v330, 0.0
          %334 = vadd.xlane.f32.xlu0 %v333
          %v335 = vpop.xlane.xlu0 %334
          %v336 = vsel %vm332, %v331, 0.0
          %337 = vadd.xlane.f32.xlu0 %v336
          %v338 = vpop.xlane.xlu0 %337
          %v339 = vrcp.pop 32.0
          %v340 = vmul.f32 %v335, %v339
          %v341 = vmul.f32 %v338, %v339
          %v342 = vsub.f32 %v330, %v340
          %v343 = vsub.f32 %v331, %v341
          %v344 = vmul.f32 %v342, %v342
          %v345 = vmul.f32 %v343, %v343
          %v346 = vsel %vm332, %v344, 0.0
          %347 = vadd.xlane.f32.xlu0 %v346
          %v348 = vpop.xlane.xlu0 %347
          %v349 = vsel %vm332, %v345, 0.0
          %350 = vadd.xlane.f32.xlu0 %v349
          %v351 = vpop.xlane.xlu0 %350
          %v352 = vmul.f32 %v348, %v339
          %v353 = vmul.f32 %v351, %v339
          %v354 = vadd.f32 %v352, 1e-05
          %v355 = vadd.f32 %v353, 1e-05
          %v356 = vrsqrt.pop %v354
          %v357 = vrsqrt.pop %v355
          %v358 = vmul.f32 %v342, %v356
          %v359 = vmul.f32 %v343, %v357
          %v360 = vpack.c.bf16 %v359, %v358
          %361 = vst.msk [vmem:[#allocation2] sm:$0xff] %vm332, %v360
          %v362 = vand.u32 2147483647, %v330
          %v363 = vand.u32 2147483647, %v331
          %v364 = vsel %vm332, %v362, 0.0
          %365 = vadd.xlane.f32.xlu0 %v364
          %v366 = vpop.xlane.xlu0 %365
          %v367 = vsel %vm332, %v363, 0.0
          %368 = vadd.xlane.f32.xlu0 %v367
          %v369 = vpop.xlane.xlu0 %368
          %vm370 = vcmp.ne.f32.partialorder %v366, 0.0
          %vm371 = vcmp.ne.f32.partialorder %v369, 0.0
          %v372 = vsel %vm370, 1, 0
          %v373 = vsel %vm371, 1, 0
          %v374 = vcvt.s32.f32 %v372
          %v375 = vcvt.s32.f32 %v373
          %vm376 = vcmask 7168
          %377 = vst.msk [vmem:[#allocation3] sm:$0xff] %vm376, %v374
          %378 = vst.msk [vmem:[#allocation3 + $0x8] sm:$0xff] %vm376, %v375
        $region56: #{projector_forward.2} parent=35 // pred_fallthru
          _
        %v379 = vld [vmem:[#allocation2] sm:$0xff]
        %v380 = vld [vmem:[#allocation7] sm:$0xf]
        %v381 = vld [vmem:[#allocation7 + $0x4] sm:$0xf]
        %v382 = vld [vmem:[#allocation7 + $0x8] sm:$0xf]
        %v383 = vld [vmem:[#allocation7 + $0xc] sm:$0xf]
        %v384 = vld [vmem:[#allocation9] sm:$0x1]
        %v386 = vlaneseq
        %v387 = vshrl.u32 %v386, 7
        %v388 = vsub.s32 0, %v387
        %v389 = vrot.slane %v384, %v388
        %v395 = vunpack.c.l.b16 %v380
        %v396 = vunpack.c.l.b16 %v381
        %v397 = vunpack.c.l.b16 %v382
        %v398 = vunpack.c.l.b16 %v383
        %v399 = vpack.c.b16 %v396, %v395
        %v400 = vpack.c.b16 %v398, %v397
        %vm403 = vcmask 261120
        %v405 = vsel %vm403, %v379, 0
        %407 = vmatprep.subr.bf16.mxu0 0
        %408 = vmatpush1.bf16.msra.mxu0 %v399
        %409 = vmatprep.subr.bf16.mxu0 0
        %410 = vmatpush1.bf16.msra.mxu0 %v400
        %411 = vmatprep.subr.bf16.mxu0 0
        %412 = vmatpush1.bf16.msra.mxu0 0
        %413 = vmatprep.subr.bf16.mxu0 0
        %414 = vmatpush1.bf16.msra.mxu0 0
        %415 = vmatprep.subr.bf16.mxu0 0
        %416 = vmatpush1.bf16.msra.mxu0 0
        %417 = vmatprep.subr.bf16.mxu0 0
        %418 = vmatpush1.bf16.msra.mxu0 0
        %419 = vmatprep.subr.bf16.mxu0 0
        %420 = vmatpush1.bf16.msra.mxu0 0
        %421 = vmatprep.subr.bf16.mxu0 0
        %422 = vmatpush1.bf16.msra.mxu0 0
        %423 = vmatprep.subr.bf16.mxu0 0
        %424 = vmatpush1.bf16.msra.mxu0 0
        %425 = vmatprep.subr.bf16.mxu0 0
        %426 = vmatpush1.bf16.msra.mxu0 0
        %427 = vmatprep.subr.bf16.mxu0 0
        %428 = vmatpush1.bf16.msra.mxu0 0
        %429 = vmatprep.subr.bf16.mxu0 0
        %430 = vmatpush1.bf16.msra.mxu0 0
        %431 = vmatprep.subr.bf16.mxu0 0
        %432 = vmatpush1.bf16.msra.mxu0 0
        %433 = vmatprep.subr.bf16.mxu0 0
        %434 = vmatpush1.bf16.msra.mxu0 0
        %435 = vmatprep.subr.bf16.mxu0 0
        %436 = vmatpush1.bf16.msra.mxu0 0
        %437 = vmatprep.subr.bf16.mxu0 0
        %438 = vmatpush1.bf16.msra.mxu0 0
        %439 = vmatprep.mubr.bf16.mxu0 0
        %440 = vmatmul.mubr.bf16.gmra.mrb[0].mxu0 %v405
        %v441 = vpop.f32.mrb[0].mxu0
        %v442 = vadd.f32 %v389, %v441
        %v443 = vpop.f32.mrb[0].mxu0
        %v444 = vpop.f32.mrb[0].mxu0
        %v445 = vadd.f32 %v389, %v444
        %v446 = vpop.f32.mrb[0].mxu0
        %447 = vdwg.mxu0
        %v448 = vld [vmem:[%s292] sm:$0x1]
        %v449 = vunpack.c.l.bf16 %v448
        %v450 = vlaneseq
        %v451 = vshrl.u32 %v450, 7
        %v452 = vsub.s32 0, %v451
        %v453 = vrot.slane %v449, %v452
        %v454 = vadd.f32 %v442, %v453
        %v455 = vadd.f32 %v445, %v453
        %v456 = vld [vmem:[#allocation3] sm:$0xff]
        %v457 = vld [vmem:[#allocation3 + $0x8] sm:$0xff]
        %459 = vset.pattern.permute.xlu0 0
        %460 = vperm.xlu0 %459, %v456
        %v461 = vpop.permute.xlu0 %460
        %464 = vset.pattern.permute.xlu0 0
        %465 = vperm.xlu0 %464, %v457
        %v466 = vpop.permute.xlu0 %465
        %v468 = vmul.f32 %v454, %v461
        %v469 = vmul.f32 %v455, %v466
        %v470 = vpack.c.bf16 %v469, %v468
        %v472 = vunpack.c.l.b16 %v470
        %v473 = vunpack.c.h.b16 %v470
        %v474 = vpack.c.b16 %v472, %v472
        %v475 = vpack.c.b16 %v473, %v473
        %478 = vst [vmem:[%s320] sm:$0xf] %v474
        %479 = vst [vmem:[%s320 + $0x4] sm:$0xf] %v475
        %s480 = sand.u32 %s164, 1
        %s481 = scalar_lea.sflag [#allocation6], %s480
        %s482 = sand.u32 %s164, 1
        %s483 = smul.addr %s482, 8
        %s484 = scalar_lea.vmem [#allocation12], %s483
        // Predicated region
        $region57: #{projector_forward.2} parent=35 // pred_check
          %p485 = pneg %p174
        $region58: #{projector_forward.2} parent=35 // pred_check_branch
          %487 = sbr.rel (%p485) target = $region60
        $region59: #{projector_forward.2} parent=35 // pred_region
          %s488 = smul.u32 2, %s31
          %s490 = ssub.s32 128, 128
          %491 = vsyncadd %s481, %s490
          %s492 = sadd.s32 %s32, %s488
          %s493 = smul.addr %s30, 2
          %s494 = sadd.s32 %s492, %s493
          %s495 = smul.addr %s494, 64
          %s496 = scalar_lea.hbm %s4, %s495
          %s497 = sshll.u32 %s484, 4
          %s498 = int_to_ptr.vmem [resolvable:$true] %s497
          %503 = dma.vmem_to_hbm [thread:$0]  %s498, 128, %s496, %s481, 64, 64, 4
        $region60: #{projector_forward.2} parent=35 // pred_fallthru
          _
      $region36: #{projector_forward.2} parent=5 // pred_fallthru
        _
      %p504 = scmp.le.s32.totalorder 2, %s20
      // Predicated region
      $region61: #{projector_forward.2} parent=5 // pred_check
        %p505 = pneg %p504
      $region62: #{projector_forward.2} parent=5 // pred_check_branch
        %507 = sbr.rel (%p505) target = $region64
      $region63: #{projector_forward.2} parent=5 // pred_region
        %s508 = ssub.s32 %s20, 2
        // Predicated region
        $region65: #{projector_forward.2} parent=63 // pred_check
          %p509 = pneg %p180
        $region66: #{projector_forward.2} parent=63 // pred_check_branch
          %511 = sbr.rel (%p509) target = $region68
        $region67: #{projector_forward.2} parent=63 // pred_region
          %s512 = sand.u32 %s165, 1
          %s513 = scalar_lea.sflag [#allocation6], %s512
          %s514 = sand.u32 %s165, 1
          %s515 = smul.addr %s514, 8
          %s516 = scalar_lea.vmem [#allocation12], %s515
          %517 = dma.done %s513, 128
        $region68: #{projector_forward.2} parent=63 // pred_fallthru
          _
      $region64: #{projector_forward.2} parent=5 // pred_fallthru
        _
    $region6: #{projector_forward.2} parent=1 // loop_footer
      %s24 = sadd.s32 1, %s20
    $region7: #{projector_forward.2} parent=1 // loop_footer_branch
      %19 = sbr.rel target = $region3
    $region8: #{projector_forward.2} parent=1 // loop_exit
      _
    %518 = vsyncpa [#allocation5], 1
    %s519 = scalar_lea.sflag [#allocation5], 1
    %520 = vsyncpa %s519, 1
    %521 = vsyncpa [#allocation8], 1
    %522 = vsyncpa [#allocation11], 1
    %s523 = scalar_lea.sflag [#allocation11], 1
    %524 = vsyncpa %s523, 1
    %525 = vsyncpa [#allocation6], 1
    %s526 = scalar_lea.sflag [#allocation6], 1
    %527 = vsyncpa %s526, 1

</llo_original>
